<compile_context>
chip_gen: v7x
topology: tpu7x:2x2x1
jax: 0.10.0
libtpu: 0.0.40
codegen_flags: <defaults>
</compile_context>

<pallas_src>
import functools

import numpy as np
import jax
import jax.numpy as jnp
from jax import lax
from jax.experimental import pallas as pl
from jax.experimental.pallas import tpu as pltpu

_PAD = 128   # flat zero margin (lanes) on each side of the (2, H*W) conv planes


# ----------------------------- Pallas kernel --------------------------------
def tcsa_kernel(x_ref, w1t_ref, w2t_ref, w1c_ref, w2c_ref, cmask_ref, wsa_ref,
                o_ref, pad_ref, *, width):
    bt, F_, C_, HW_ = x_ref.shape
    inv_chw = 1.0 / float(C_ * HW_)
    inv_fhw = 1.0 / float(F_ * HW_)
    inv_fc = 1.0 / float(F_ * C_)

    w1t = w1t_ref[...]          # (F, T_HID)  == W1t^T
    w2t = w2t_ref[...]          # (F, T_HID)  == W2t
    w1c = w1c_ref[...]          # (C_HID, C)  == W1c
    w2c = w2c_ref[...]          # (C_HID, C)  == W2c^T
    mask_l = cmask_ref[0:1, :]  # (1, HW) 1.0 where the column-1 neighbour exists
    mask_r = cmask_ref[1:2, :]  # (1, HW) 1.0 where the column+1 neighbour exists

    # Zero only the conv-scratch margins (the interior [_PAD:_PAD+HW] is fully
    # overwritten every iteration).  Done unconditionally so every TensorCore's
    # private scratch is initialized even when the grid is megacore-split.
    pad_ref[:, 0:_PAD] = jnp.zeros((2, _PAD), jnp.float32)
    pad_ref[:, _PAD + HW_:_PAD + HW_ + _PAD] = jnp.zeros((2, _PAD), jnp.float32)

    def mlp_t(p):               # (F, 1) -> (F, 1)
        h = jnp.maximum(jnp.sum(w1t * p, axis=0, keepdims=True), 0.0)   # (1, T_HID)
        return jnp.sum(w2t * h, axis=1, keepdims=True)                  # (F, 1)

    def mlp_c(p):               # (1, C) -> (1, C)
        h = jnp.maximum(jnp.sum(w1c * p, axis=1, keepdims=True), 0.0)   # (C_HID, 1)
        return jnp.sum(w2c * h, axis=0, keepdims=True)                  # (1, C)

    @pl.loop(0, bt)             # scf.for over the batch block: flat live ranges
    def _(b):
        x3 = x_ref[b]                                     # (F, C, HW) lane-dense

        # ---- single pooling pass over HW, reused by time AND channel attn ---
        s = jnp.sum(x3, axis=2)                           # (F, C)
        m = jnp.max(x3, axis=2)                           # (F, C)

        # ---- time attention -------------------------------------------------
        ta_avg = jnp.sum(s, axis=1, keepdims=True) * inv_chw      # (F, 1)
        ta_max = jnp.max(m, axis=1, keepdims=True)                # (F, 1)
        t_att = jax.nn.sigmoid(mlp_t(ta_avg) + mlp_t(ta_max))     # (F, 1)

        # ---- channel attention ----------------------------------------------
        # Reusing m relies on max(t*x) == t*max(x), valid because
        # t_att = sigmoid(.) > 0.  (Revisit if the activation ever changes.)
        ca_avg = jnp.sum(t_att * s, axis=0, keepdims=True) * inv_fhw   # (1, C)
        ca_max = jnp.max(t_att * m, axis=0, keepdims=True)             # (1, C)
        c_att = jax.nn.sigmoid(mlp_c(ca_avg) + mlp_c(ca_max))          # (1, C)

        scale = t_att * c_att                             # (F, C) fused t*c scale

        # ---- spatial pooling of (scale * x) WITHOUT materializing it --------
        # Stream F slabs of (1, C, HW); per-slab working set is ~4 vregs.
        slab = x3[0:1] * scale[0:1, :, None]              # (1, C, HW)
        sa_sum = jnp.sum(slab, axis=1)                    # (1, HW)
        sa_max = jnp.max(slab, axis=1)                    # (1, HW)
        for f in range(1, F_):                            # tiny static unroll
            slab = x3[f:f + 1] * scale[f:f + 1, :, None]
            sa_sum = sa_sum + jnp.sum(slab, axis=1)
            sa_max = jnp.maximum(sa_max, jnp.max(slab, axis=1))
        sa_avg = sa_sum * inv_fc

        # ---- flat 3x3 SAME conv on the pooled planes ------------------------
        pad_ref[0:1, _PAD:_PAD + HW_] = sa_avg            # 128-aligned stores
        pad_ref[1:2, _PAD:_PAD + HW_] = sa_max

        acc = jnp.zeros((1, HW_), jnp.float32)
        k = 0
        for dy in (-1, 0, 1):
            for dx in (-1, 0, 1):
                off = _PAD + dy * width + dx
                sh = pad_ref[:, off:off + HW_]            # one shifted (2, HW) load
                tap = wsa_ref[0, k] * sh[0:1] + wsa_ref[1, k] * sh[1:2]
                if dx == -1:
                    tap = tap * mask_l
                elif dx == 1:
                    tap = tap * mask_r
                acc = acc + tap
                k += 1
        s_att = jax.nn.sigmoid(acc)                       # (1, HW)

        # ---- apply attentions + final ReLU in one fused pass ----------------
        o_ref[b] = jnp.maximum(x3 * scale[:, :, None] * s_att, 0.0)


# ------------------------------ host helpers ---------------------------------
def _tpu_caps():
    """Best-effort (vmem_bytes, n_tensorcores_per_chip); conservative fallback."""
    vmem = 64 << 20
    try:
        vmem = int(pltpu.get_tpu_info().vmem_capacity_bytes)
    except Exception:
        pass
    cores = 1
    try:
        if "v7" in str(jax.devices()[0].device_kind).lower():
            cores = 2
    except Exception:
        pass
    return vmem, cores


def _pick_block_batch(batch, per_batch_bytes, *, vmem_bytes, n_cores):
    # ~6 MiB blocks on 1-TC chips (v5e/v6e, 128 MiB VMEM), ~3 MiB on 2-TC chips
    # (v7x, 64 MiB VMEM).  Input and output blocks are each double-buffered.
    target = (3 << 20) if n_cores >= 2 else (6 << 20)
    target = min(target, vmem_bytes // 10)
    cap = max(1, target // per_batch_bytes)
    if n_cores >= 2 and batch >= 2:
        cap = min(cap, batch // 2)        # keep >= 2 grid steps for megacore
    cap = int(max(1, min(cap, batch)))
    bt = 1
    for d in range(1, cap + 1):
        if batch % d == 0:
            bt = d
    return bt


# ------------------------------ host wrapper ---------------------------------
def tcsa_pallas(x, w1t, w2t, w1c, w2c, wsa, *, block_batch=None):
    """x: (B, F, C, H, W) f32.
       w1t: (T_HID, F), w2t: (F, T_HID)   -- TimeAttention shared MLP (1x1x1 convs)
       w1c: (C_HID, C), w2c: (C, C_HID)   -- ChannelAttention shared MLP
       wsa: (2, 3, 3)                     -- SpatialAttention conv2d weight[0]"""
    B, F, C, H, W = x.shape
    HW = H * W
    assert W + 1 <= _PAD, "spatial width too large for the flat conv margin"
    assert C % 8 == 0, "C must be a multiple of 8 (f32 sublane tiling)"
    assert HW % 128 == 0, "H*W must be a multiple of 128 (lane-dense stores)"
    t_hid = w1t.shape[0]
    c_hid = w1c.shape[0]

    # lane-dense layout: collapse (H, W) -> H*W (contiguous, free on host)
    x_flat = jnp.asarray(x, jnp.float32).reshape(B, F, C, HW)

    # orient the tiny MLP weights so the kernel is broadcast-mul + reduce
    w1t_in = jnp.asarray(w1t, jnp.float32).T            # (F, T_HID)
    w2t_in = jnp.asarray(w2t, jnp.float32)              # (F, T_HID)
    w1c_in = jnp.asarray(w1c, jnp.float32)              # (C_HID, C)
    w2c_in = jnp.asarray(w2c, jnp.float32).T            # (C_HID, C)
    wsa_in = jnp.asarray(wsa, jnp.float32).reshape(2, 9)

    # column-validity masks for the flat 3x3 conv (1.0 = neighbour column valid)
    col = np.tile(np.arange(W, dtype=np.int32), H)
    cmask_in = jnp.asarray(np.stack([(col >= 1).astype(np.float32),        # dx=-1
                                     (col <= W - 2).astype(np.float32)]))  # dx=+1

    vmem_bytes, n_cores = _tpu_caps()
    if block_batch is None:
        block_batch = _pick_block_batch(B, F * C * HW * 4,
                                        vmem_bytes=vmem_bytes, n_cores=n_cores)
    bt = int(block_batch)
    assert B % bt == 0

    vmem_limit = int(max(32 << 20, min(vmem_bytes * 3 // 4, 96 << 20)))

    kernel = functools.partial(tcsa_kernel, width=W)

    grid_spec = pltpu.PrefetchScalarGridSpec(
        num_scalar_prefetch=0,
        grid=(B // bt,),
        in_specs=[
            pl.BlockSpec((bt, F, C, HW), lambda b: (b, 0, 0, 0)),
            pl.BlockSpec((F, t_hid), lambda b: (0, 0)),
            pl.BlockSpec((F, t_hid), lambda b: (0, 0)),
            pl.BlockSpec((c_hid, C), lambda b: (0, 0)),
            pl.BlockSpec((c_hid, C), lambda b: (0, 0)),
            pl.BlockSpec((2, HW), lambda b: (0, 0)),
            pl.BlockSpec(memory_space=pltpu.MemorySpace.SMEM),
        ],
        out_specs=pl.BlockSpec((bt, F, C, HW), lambda b: (b, 0, 0, 0)),
        scratch_shapes=[pltpu.VMEM((2, 2 * _PAD + HW), jnp.float32)],
    )

    out_flat = pl.pallas_call(
        kernel,
        out_shape=jax.ShapeDtypeStruct((B, F, C, HW), jnp.float32),
        grid_spec=grid_spec,
        compiler_params=pltpu.CompilerParams(
            dimension_semantics=("parallel",),
            vmem_limit_bytes=vmem_limit),
    )(x_flat, w1t_in, w2t_in, w1c_in, w2c_in, cmask_in, wsa_in)

    return out_flat.reshape(B, F, C, H, W)


# --------------------------- pure-JAX reference -------------------------------
def tcsa_ref(x, w1t, w2t, w1c, w2c, wsa):
    # TimeAttention
    pa = x.mean(axis=(2, 3, 4))                              # (B, F)
    pm = x.max(axis=(2, 3, 4))                               # (B, F)
    mlp_t = lambda v: jnp.maximum(v @ w1t.T, 0.0) @ w2t.T
    t_att = jax.nn.sigmoid(mlp_t(pa) + mlp_t(pm))            # (B, F)
    out1 = x * t_att[:, :, None, None, None]
    # ChannelAttention
    ca = out1.mean(axis=(1, 3, 4))                           # (B, C)
    cm = out1.max(axis=(1, 3, 4))
    mlp_c = lambda v: jnp.maximum(v @ w1c.T, 0.0) @ w2c.T
    c_att = jax.nn.sigmoid(mlp_c(ca) + mlp_c(cm))            # (B, C)
    out2 = out1 * c_att[:, None, :, None, None]
    # SpatialAttention
    sa = out2.mean(axis=(1, 2))                              # (B, H, W)
    sm = out2.max(axis=(1, 2))
    inp = jnp.stack([sa, sm], axis=1)                        # (B, 2, H, W)
    conv = lax.conv_general_dilated(
        inp, wsa[None], window_strides=(1, 1), padding="SAME",
        dimension_numbers=("NCHW", "OIHW", "NCHW"))          # (B, 1, H, W)
    s_att = jax.nn.sigmoid(conv)[:, :, None, :, :]           # (B, 1, 1, H, W)
    return jnp.maximum(out2 * s_att, 0.0)


# ---------------------------------- main --------------------------------------
if __name__ == "__main__":
    # timeWindows=8, channels=16, t_ratio=4, c_ratio=4
    B, F, C, H, W = 2, 8, 16, 16, 16
    T_RATIO, C_RATIO = 4, 4
    T_HID, C_HID = F // T_RATIO, C // C_RATIO

    key = jax.random.PRNGKey(0)
    kx, k1, k2, k3, k4, k5 = jax.random.split(key, 6)
    x = jax.random.normal(kx, (B, F, C, H, W), jnp.float32)
    w1t = jax.random.normal(k1, (T_HID, F), jnp.float32) * 0.3
    w2t = jax.random.normal(k2, (F, T_HID), jnp.float32) * 0.3
    w1c = jax.random.normal(k3, (C_HID, C), jnp.float32) * 0.3
    w2c = jax.random.normal(k4, (C, C_HID), jnp.float32) * 0.3
    wsa = jax.random.normal(k5, (2, 3, 3), jnp.float32) * 0.3

    out = tcsa_pallas(x, w1t, w2t, w1c, w2c, wsa)
    out = jax.block_until_ready(out)

    ref = jax.block_until_ready(tcsa_ref(x, w1t, w2t, w1c, w2c, wsa))
    if not bool(jnp.allclose(out, ref, rtol=1e-3, atol=1e-4)):
        raise AssertionError(
            f"Pallas TCSA mismatch, max abs err = {float(jnp.max(jnp.abs(out - ref)))}")

    print("KERNEL_OK")
</pallas_src>

<mosaic_0001>
module attributes {stable_mosaic.version = 11 : i64} {
  func.func @tcsa_kernel(%arg0: i32, %arg1: memref<2x8x16x256xf32, #tpu.memory_space<vmem>>, %arg2: memref<8x2xf32, #tpu.memory_space<vmem>>, %arg3: memref<8x2xf32, #tpu.memory_space<vmem>>, %arg4: memref<4x16xf32, #tpu.memory_space<vmem>>, %arg5: memref<4x16xf32, #tpu.memory_space<vmem>>, %arg6: memref<2x256xf32, #tpu.memory_space<vmem>>, %arg7: memref<2x9xf32, #tpu.memory_space<smem>>, %arg8: memref<2x8x16x256xf32, #tpu.memory_space<vmem>>, %arg9: memref<2x512xf32, #tpu.memory_space<vmem>>) attributes {dimension_semantics = [#tpu.dimension_semantics<parallel>], iteration_bounds = array<i64: 1>, scalar_prefetch = 0 : i64, scratch_operands = 1 : i64, tpu.core_type = #tpu.core_type<tc>, window_params = [{transform_indices = @transform_0, window_bounds = array<i64: 2, 8, 16, 256>}, {pipeline_mode = #tpu.pipeline_mode<synchronous>, transform_indices = @transform_1, window_bounds = array<i64: 8, 2>}, {pipeline_mode = #tpu.pipeline_mode<synchronous>, transform_indices = @transform_2, window_bounds = array<i64: 8, 2>}, {pipeline_mode = #tpu.pipeline_mode<synchronous>, transform_indices = @transform_3, window_bounds = array<i64: 4, 16>}, {pipeline_mode = #tpu.pipeline_mode<synchronous>, transform_indices = @transform_4, window_bounds = array<i64: 4, 16>}, {pipeline_mode = #tpu.pipeline_mode<synchronous>, transform_indices = @transform_5, window_bounds = array<i64: 2, 256>}, {transform_indices = @transform_6, window_bounds = array<i64: 2, 9>}, {transform_indices = @transform_7, window_bounds = array<i64: 2, 8, 16, 256>}]} {
    %c0 = arith.constant 0 : index
    %c0_0 = arith.constant 0 : index
    %0 = vector.load %arg2[%c0, %c0_0] : memref<8x2xf32, #tpu.memory_space<vmem>>, vector<8x2xf32>
    %c0_1 = arith.constant 0 : index
    %c0_2 = arith.constant 0 : index
    %1 = vector.load %arg3[%c0_1, %c0_2] : memref<8x2xf32, #tpu.memory_space<vmem>>, vector<8x2xf32>
    %c0_3 = arith.constant 0 : index
    %c0_4 = arith.constant 0 : index
    %2 = vector.load %arg4[%c0_3, %c0_4] : memref<4x16xf32, #tpu.memory_space<vmem>>, vector<4x16xf32>
    %c0_5 = arith.constant 0 : index
    %c0_6 = arith.constant 0 : index
    %3 = vector.load %arg5[%c0_5, %c0_6] : memref<4x16xf32, #tpu.memory_space<vmem>>, vector<4x16xf32>
    %c0_7 = arith.constant 0 : index
    %c0_8 = arith.constant 0 : index
    %4 = vector.load %arg6[%c0_7, %c0_8] : memref<2x256xf32, #tpu.memory_space<vmem>>, vector<1x256xf32>
    %c1 = arith.constant 1 : index
    %c0_9 = arith.constant 0 : index
    %5 = vector.load %arg6[%c1, %c0_9] : memref<2x256xf32, #tpu.memory_space<vmem>>, vector<1x256xf32>
    %cst = arith.constant 0.000000e+00 : f32
    %6 = vector.broadcast %cst : f32 to vector<2x128xf32>
    %c0_10 = arith.constant 0 : index
    %c0_11 = arith.constant 0 : index
    %7 = vector.load %arg9[%c0_10, %c0_11] : memref<2x512xf32, #tpu.memory_space<vmem>>, vector<2x128xf32>
    tpu.vector_store %arg9[%c0_10, %c0_11], %6 {strides = array<i32>} : memref<2x512xf32, #tpu.memory_space<vmem>>, vector<2x128xf32>,
    %cst_12 = arith.constant 0.000000e+00 : f32
    %8 = vector.broadcast %cst_12 : f32 to vector<2x128xf32>
    %c0_13 = arith.constant 0 : index
    %c384 = arith.constant 384 : index
    %9 = vector.load %arg9[%c0_13, %c384] : memref<2x512xf32, #tpu.memory_space<vmem>>, vector<2x128xf32>
    tpu.vector_store %arg9[%c0_13, %c384], %8 {strides = array<i32>} : memref<2x512xf32, #tpu.memory_space<vmem>>, vector<2x128xf32>,
    %c0_i32 = arith.constant 0 : i32
    %c2_i32 = arith.constant 2 : i32
    %10 = arith.addi %c0_i32, %c2_i32 : i32
    %c1_i32 = arith.constant 1 : i32
    scf.for %arg10 = %c0_i32 to %10 step %c1_i32  : i32 {
      %c1_i32_15 = arith.constant 1 : i32
      %11 = arith.muli %arg10, %c1_i32_15 : i32
      %c0_i32_16 = arith.constant 0 : i32
      %12 = arith.addi %c0_i32_16, %11 : i32
      %13 = arith.index_cast %12 : i32 to index
      %c0_17 = arith.constant 0 : index
      %c0_18 = arith.constant 0 : index
      %c0_19 = arith.constant 0 : index
      %14 = vector.load %arg1[%13, %c0_17, %c0_18, %c0_19] : memref<2x8x16x256xf32, #tpu.memory_space<vmem>>, vector<1x8x16x256xf32>
      %15 = vector.shape_cast %14 : vector<1x8x16x256xf32> to vector<8x16x256xf32>
      %cst_20 = arith.constant dense<0.000000e+00> : vector<8x16xf32>
      %16 = vector.multi_reduction <add>, %15, %cst_20 [2] : vector<8x16x256xf32> to vector<8x16xf32>
      %cst_21 = arith.constant dense<0xFF800000> : vector<8x16xf32>
      %17 = vector.multi_reduction <maximumf>, %15, %cst_21 [2] : vector<8x16x256xf32> to vector<8x16xf32>
      %cst_22 = arith.constant dense<0.000000e+00> : vector<8xf32>
      %18 = vector.multi_reduction <add>, %16, %cst_22 [1] : vector<8x16xf32> to vector<8xf32>
      %19 = vector.shape_cast %18 : vector<8xf32> to vector<8x1xf32>
      %cst_23 = arith.constant 2.44140625E-4 : f32
      %20 = vector.broadcast %cst_23 : f32 to vector<8x1xf32>
      %21 = arith.mulf %19, %20 : vector<8x1xf32>
      %cst_24 = arith.constant dense<0xFF800000> : vector<8xf32>
      %22 = vector.multi_reduction <maximumf>, %17, %cst_24 [1] : vector<8x16xf32> to vector<8xf32>
      %23 = vector.shape_cast %22 : vector<8xf32> to vector<8x1xf32>
      %24 = vector.broadcast %21 : vector<8x1xf32> to vector<8x2xf32>
      %25 = arith.mulf %0, %24 : vector<8x2xf32>
      %cst_25 = arith.constant dense<0.000000e+00> : vector<2xf32>
      %26 = vector.multi_reduction <add>, %25, %cst_25 [0] : vector<8x2xf32> to vector<2xf32>
      %27 = vector.shape_cast %26 : vector<2xf32> to vector<1x2xf32>
      %cst_26 = arith.constant 0.000000e+00 : f32
      %28 = vector.broadcast %cst_26 : f32 to vector<1x2xf32>
      %29 = arith.maximumf %27, %28 : vector<1x2xf32>
      %30 = vector.broadcast %29 : vector<1x2xf32> to vector<8x2xf32>
      %31 = arith.mulf %1, %30 : vector<8x2xf32>
      %cst_27 = arith.constant dense<0.000000e+00> : vector<8xf32>
      %32 = vector.multi_reduction <add>, %31, %cst_27 [1] : vector<8x2xf32> to vector<8xf32>
      %33 = vector.shape_cast %32 : vector<8xf32> to vector<8x1xf32>
      %34 = vector.broadcast %23 : vector<8x1xf32> to vector<8x2xf32>
      %35 = arith.mulf %0, %34 : vector<8x2xf32>
      %cst_28 = arith.constant dense<0.000000e+00> : vector<2xf32>
      %36 = vector.multi_reduction <add>, %35, %cst_28 [0] : vector<8x2xf32> to vector<2xf32>
      %37 = vector.shape_cast %36 : vector<2xf32> to vector<1x2xf32>
      %cst_29 = arith.constant 0.000000e+00 : f32
      %38 = vector.broadcast %cst_29 : f32 to vector<1x2xf32>
      %39 = arith.maximumf %37, %38 : vector<1x2xf32>
      %40 = vector.broadcast %39 : vector<1x2xf32> to vector<8x2xf32>
      %41 = arith.mulf %1, %40 : vector<8x2xf32>
      %cst_30 = arith.constant dense<0.000000e+00> : vector<8xf32>
      %42 = vector.multi_reduction <add>, %41, %cst_30 [1] : vector<8x2xf32> to vector<8xf32>
      %43 = vector.shape_cast %42 : vector<8xf32> to vector<8x1xf32>
      %44 = arith.addf %33, %43 : vector<8x1xf32>
      %45 = arith.negf %44 : vector<8x1xf32>
      %46 = math.exp %45 : vector<8x1xf32>
      %cst_31 = arith.constant 1.000000e+00 : f32
      %47 = vector.broadcast %cst_31 : f32 to vector<8x1xf32>
      %48 = arith.addf %47, %46 : vector<8x1xf32>
      %49 = arith.divf %47, %48 : vector<8x1xf32>
      %50 = vector.broadcast %49 : vector<8x1xf32> to vector<8x16xf32>
      %51 = arith.mulf %50, %16 : vector<8x16xf32>
      %cst_32 = arith.constant dense<0.000000e+00> : vector<16xf32>
      %52 = vector.multi_reduction <add>, %51, %cst_32 [0] : vector<8x16xf32> to vector<16xf32>
      %53 = vector.shape_cast %52 : vector<16xf32> to vector<1x16xf32>
      %cst_33 = arith.constant 4.8828125E-4 : f32
      %54 = vector.broadcast %cst_33 : f32 to vector<1x16xf32>
      %55 = arith.mulf %53, %54 : vector<1x16xf32>
      %56 = vector.broadcast %49 : vector<8x1xf32> to vector<8x16xf32>
      %57 = arith.mulf %56, %17 : vector<8x16xf32>
      %cst_34 = arith.constant dense<0xFF800000> : vector<16xf32>
      %58 = vector.multi_reduction <maximumf>, %57, %cst_34 [0] : vector<8x16xf32> to vector<16xf32>
      %59 = vector.shape_cast %58 : vector<16xf32> to vector<1x16xf32>
      %60 = vector.broadcast %55 : vector<1x16xf32> to vector<4x16xf32>
      %61 = arith.mulf %2, %60 : vector<4x16xf32>
      %cst_35 = arith.constant dense<0.000000e+00> : vector<4xf32>
      %62 = vector.multi_reduction <add>, %61, %cst_35 [1] : vector<4x16xf32> to vector<4xf32>
      %63 = vector.shape_cast %62 : vector<4xf32> to vector<4x1xf32>
      %cst_36 = arith.constant 0.000000e+00 : f32
      %64 = vector.broadcast %cst_36 : f32 to vector<4x1xf32>
      %65 = arith.maximumf %63, %64 : vector<4x1xf32>
      %66 = vector.broadcast %65 : vector<4x1xf32> to vector<4x16xf32>
      %67 = arith.mulf %3, %66 : vector<4x16xf32>
      %cst_37 = arith.constant dense<0.000000e+00> : vector<16xf32>
      %68 = vector.multi_reduction <add>, %67, %cst_37 [0] : vector<4x16xf32> to vector<16xf32>
      %69 = vector.shape_cast %68 : vector<16xf32> to vector<1x16xf32>
      %70 = vector.broadcast %59 : vector<1x16xf32> to vector<4x16xf32>
      %71 = arith.mulf %2, %70 : vector<4x16xf32>
      %cst_38 = arith.constant dense<0.000000e+00> : vector<4xf32>
      %72 = vector.multi_reduction <add>, %71, %cst_38 [1] : vector<4x16xf32> to vector<4xf32>
      %73 = vector.shape_cast %72 : vector<4xf32> to vector<4x1xf32>
      %cst_39 = arith.constant 0.000000e+00 : f32
      %74 = vector.broadcast %cst_39 : f32 to vector<4x1xf32>
      %75 = arith.maximumf %73, %74 : vector<4x1xf32>
      %76 = vector.broadcast %75 : vector<4x1xf32> to vector<4x16xf32>
      %77 = arith.mulf %3, %76 : vector<4x16xf32>
      %cst_40 = arith.constant dense<0.000000e+00> : vector<16xf32>
      %78 = vector.multi_reduction <add>, %77, %cst_40 [0] : vector<4x16xf32> to vector<16xf32>
      %79 = vector.shape_cast %78 : vector<16xf32> to vector<1x16xf32>
      %80 = arith.addf %69, %79 : vector<1x16xf32>
      %81 = arith.negf %80 : vector<1x16xf32>
      %82 = math.exp %81 : vector<1x16xf32>
      %cst_41 = arith.constant 1.000000e+00 : f32
      %83 = vector.broadcast %cst_41 : f32 to vector<1x16xf32>
      %84 = arith.addf %83, %82 : vector<1x16xf32>
      %85 = arith.divf %83, %84 : vector<1x16xf32>
      %86 = vector.broadcast %49 : vector<8x1xf32> to vector<8x16xf32>
      %87 = vector.broadcast %85 : vector<1x16xf32> to vector<8x16xf32>
      %88 = arith.mulf %86, %87 : vector<8x16xf32>
      %89 = vector.extract_strided_slice %15 {offsets = [0, 0, 0], sizes = [1, 16, 256], strides = [1, 1, 1]} : vector<8x16x256xf32> to vector<1x16x256xf32>
      %90 = vector.extract_strided_slice %88 {offsets = [0, 0], sizes = [1, 16], strides = [1, 1]} : vector<8x16xf32> to vector<1x16xf32>
      %91 = vector.shape_cast %90 : vector<1x16xf32> to vector<1x16x1xf32>
      %92 = vector.broadcast %91 : vector<1x16x1xf32> to vector<1x16x256xf32>
      %93 = arith.mulf %89, %92 : vector<1x16x256xf32>
      %cst_42 = arith.constant dense<0.000000e+00> : vector<1x256xf32>
      %94 = vector.multi_reduction <add>, %93, %cst_42 [1] : vector<1x16x256xf32> to vector<1x256xf32>
      %cst_43 = arith.constant dense<0xFF800000> : vector<1x256xf32>
      %95 = vector.multi_reduction <maximumf>, %93, %cst_43 [1] : vector<1x16x256xf32> to vector<1x256xf32>
      %96 = vector.extract_strided_slice %15 {offsets = [1, 0, 0], sizes = [1, 16, 256], strides = [1, 1, 1]} : vector<8x16x256xf32> to vector<1x16x256xf32>
      %97 = vector.extract_strided_slice %88 {offsets = [1, 0], sizes = [1, 16], strides = [1, 1]} : vector<8x16xf32> to vector<1x16xf32>
      %98 = vector.shape_cast %97 : vector<1x16xf32> to vector<1x16x1xf32>
      %99 = vector.broadcast %98 : vector<1x16x1xf32> to vector<1x16x256xf32>
      %100 = arith.mulf %96, %99 : vector<1x16x256xf32>
      %cst_44 = arith.constant dense<0.000000e+00> : vector<1x256xf32>
      %101 = vector.multi_reduction <add>, %100, %cst_44 [1] : vector<1x16x256xf32> to vector<1x256xf32>
      %102 = arith.addf %94, %101 : vector<1x256xf32>
      %cst_45 = arith.constant dense<0xFF800000> : vector<1x256xf32>
      %103 = vector.multi_reduction <maximumf>, %100, %cst_45 [1] : vector<1x16x256xf32> to vector<1x256xf32>
      %104 = arith.maximumf %95, %103 : vector<1x256xf32>
      %105 = vector.extract_strided_slice %15 {offsets = [2, 0, 0], sizes = [1, 16, 256], strides = [1, 1, 1]} : vector<8x16x256xf32> to vector<1x16x256xf32>
      %106 = vector.extract_strided_slice %88 {offsets = [2, 0], sizes = [1, 16], strides = [1, 1]} : vector<8x16xf32> to vector<1x16xf32>
      %107 = vector.shape_cast %106 : vector<1x16xf32> to vector<1x16x1xf32>
      %108 = vector.broadcast %107 : vector<1x16x1xf32> to vector<1x16x256xf32>
      %109 = arith.mulf %105, %108 : vector<1x16x256xf32>
      %cst_46 = arith.constant dense<0.000000e+00> : vector<1x256xf32>
      %110 = vector.multi_reduction <add>, %109, %cst_46 [1] : vector<1x16x256xf32> to vector<1x256xf32>
      %111 = arith.addf %102, %110 : vector<1x256xf32>
      %cst_47 = arith.constant dense<0xFF800000> : vector<1x256xf32>
      %112 = vector.multi_reduction <maximumf>, %109, %cst_47 [1] : vector<1x16x256xf32> to vector<1x256xf32>
      %113 = arith.maximumf %104, %112 : vector<1x256xf32>
      %114 = vector.extract_strided_slice %15 {offsets = [3, 0, 0], sizes = [1, 16, 256], strides = [1, 1, 1]} : vector<8x16x256xf32> to vector<1x16x256xf32>
      %115 = vector.extract_strided_slice %88 {offsets = [3, 0], sizes = [1, 16], strides = [1, 1]} : vector<8x16xf32> to vector<1x16xf32>
      %116 = vector.shape_cast %115 : vector<1x16xf32> to vector<1x16x1xf32>
      %117 = vector.broadcast %116 : vector<1x16x1xf32> to vector<1x16x256xf32>
      %118 = arith.mulf %114, %117 : vector<1x16x256xf32>
      %cst_48 = arith.constant dense<0.000000e+00> : vector<1x256xf32>
      %119 = vector.multi_reduction <add>, %118, %cst_48 [1] : vector<1x16x256xf32> to vector<1x256xf32>
      %120 = arith.addf %111, %119 : vector<1x256xf32>
      %cst_49 = arith.constant dense<0xFF800000> : vector<1x256xf32>
      %121 = vector.multi_reduction <maximumf>, %118, %cst_49 [1] : vector<1x16x256xf32> to vector<1x256xf32>
      %122 = arith.maximumf %113, %121 : vector<1x256xf32>
      %123 = vector.extract_strided_slice %15 {offsets = [4, 0, 0], sizes = [1, 16, 256], strides = [1, 1, 1]} : vector<8x16x256xf32> to vector<1x16x256xf32>
      %124 = vector.extract_strided_slice %88 {offsets = [4, 0], sizes = [1, 16], strides = [1, 1]} : vector<8x16xf32> to vector<1x16xf32>
      %125 = vector.shape_cast %124 : vector<1x16xf32> to vector<1x16x1xf32>
      %126 = vector.broadcast %125 : vector<1x16x1xf32> to vector<1x16x256xf32>
      %127 = arith.mulf %123, %126 : vector<1x16x256xf32>
      %cst_50 = arith.constant dense<0.000000e+00> : vector<1x256xf32>
      %128 = vector.multi_reduction <add>, %127, %cst_50 [1] : vector<1x16x256xf32> to vector<1x256xf32>
      %129 = arith.addf %120, %128 : vector<1x256xf32>
      %cst_51 = arith.constant dense<0xFF800000> : vector<1x256xf32>
      %130 = vector.multi_reduction <maximumf>, %127, %cst_51 [1] : vector<1x16x256xf32> to vector<1x256xf32>
      %131 = arith.maximumf %122, %130 : vector<1x256xf32>
      %132 = vector.extract_strided_slice %15 {offsets = [5, 0, 0], sizes = [1, 16, 256], strides = [1, 1, 1]} : vector<8x16x256xf32> to vector<1x16x256xf32>
      %133 = vector.extract_strided_slice %88 {offsets = [5, 0], sizes = [1, 16], strides = [1, 1]} : vector<8x16xf32> to vector<1x16xf32>
      %134 = vector.shape_cast %133 : vector<1x16xf32> to vector<1x16x1xf32>
      %135 = vector.broadcast %134 : vector<1x16x1xf32> to vector<1x16x256xf32>
      %136 = arith.mulf %132, %135 : vector<1x16x256xf32>
      %cst_52 = arith.constant dense<0.000000e+00> : vector<1x256xf32>
      %137 = vector.multi_reduction <add>, %136, %cst_52 [1] : vector<1x16x256xf32> to vector<1x256xf32>
      %138 = arith.addf %129, %137 : vector<1x256xf32>
      %cst_53 = arith.constant dense<0xFF800000> : vector<1x256xf32>
      %139 = vector.multi_reduction <maximumf>, %136, %cst_53 [1] : vector<1x16x256xf32> to vector<1x256xf32>
      %140 = arith.maximumf %131, %139 : vector<1x256xf32>
      %141 = vector.extract_strided_slice %15 {offsets = [6, 0, 0], sizes = [1, 16, 256], strides = [1, 1, 1]} : vector<8x16x256xf32> to vector<1x16x256xf32>
      %142 = vector.extract_strided_slice %88 {offsets = [6, 0], sizes = [1, 16], strides = [1, 1]} : vector<8x16xf32> to vector<1x16xf32>
      %143 = vector.shape_cast %142 : vector<1x16xf32> to vector<1x16x1xf32>
      %144 = vector.broadcast %143 : vector<1x16x1xf32> to vector<1x16x256xf32>
      %145 = arith.mulf %141, %144 : vector<1x16x256xf32>
      %cst_54 = arith.constant dense<0.000000e+00> : vector<1x256xf32>
      %146 = vector.multi_reduction <add>, %145, %cst_54 [1] : vector<1x16x256xf32> to vector<1x256xf32>
      %147 = arith.addf %138, %146 : vector<1x256xf32>
      %cst_55 = arith.constant dense<0xFF800000> : vector<1x256xf32>
      %148 = vector.multi_reduction <maximumf>, %145, %cst_55 [1] : vector<1x16x256xf32> to vector<1x256xf32>
      %149 = arith.maximumf %140, %148 : vector<1x256xf32>
      %150 = vector.extract_strided_slice %15 {offsets = [7, 0, 0], sizes = [1, 16, 256], strides = [1, 1, 1]} : vector<8x16x256xf32> to vector<1x16x256xf32>
      %151 = vector.extract_strided_slice %88 {offsets = [7, 0], sizes = [1, 16], strides = [1, 1]} : vector<8x16xf32> to vector<1x16xf32>
      %152 = vector.shape_cast %151 : vector<1x16xf32> to vector<1x16x1xf32>
      %153 = vector.broadcast %152 : vector<1x16x1xf32> to vector<1x16x256xf32>
      %154 = arith.mulf %150, %153 : vector<1x16x256xf32>
      %cst_56 = arith.constant dense<0.000000e+00> : vector<1x256xf32>
      %155 = vector.multi_reduction <add>, %154, %cst_56 [1] : vector<1x16x256xf32> to vector<1x256xf32>
      %156 = arith.addf %147, %155 : vector<1x256xf32>
      %cst_57 = arith.constant dense<0xFF800000> : vector<1x256xf32>
      %157 = vector.multi_reduction <maximumf>, %154, %cst_57 [1] : vector<1x16x256xf32> to vector<1x256xf32>
      %158 = arith.maximumf %149, %157 : vector<1x256xf32>
      %cst_58 = arith.constant 7.812500e-03 : f32
      %159 = vector.broadcast %cst_58 : f32 to vector<1x256xf32>
      %160 = arith.mulf %156, %159 : vector<1x256xf32>
      %c0_59 = arith.constant 0 : index
      %c128 = arith.constant 128 : index
      %161 = vector.load %arg9[%c0_59, %c128] : memref<2x512xf32, #tpu.memory_space<vmem>>, vector<1x256xf32>
      tpu.vector_store %arg9[%c0_59, %c128], %160 {strides = array<i32>} : memref<2x512xf32, #tpu.memory_space<vmem>>, vector<1x256xf32>,
      %c1_60 = arith.constant 1 : index
      %c128_61 = arith.constant 128 : index
      %162 = vector.load %arg9[%c1_60, %c128_61] : memref<2x512xf32, #tpu.memory_space<vmem>>, vector<1x256xf32>
      tpu.vector_store %arg9[%c1_60, %c128_61], %158 {strides = array<i32>} : memref<2x512xf32, #tpu.memory_space<vmem>>, vector<1x256xf32>,
      %cst_62 = arith.constant 0.000000e+00 : f32
      %163 = vector.broadcast %cst_62 : f32 to vector<1x256xf32>
      %c0_63 = arith.constant 0 : index
      %c111 = arith.constant 111 : index
      %164 = vector.load %arg9[%c0_63, %c111] : memref<2x512xf32, #tpu.memory_space<vmem>>, vector<2x256xf32>
      %c0_64 = arith.constant 0 : index
      %c0_65 = arith.constant 0 : index
      %165 = memref.load %arg7[%c0_64, %c0_65] : memref<2x9xf32, #tpu.memory_space<smem>>
      %166 = vector.extract_strided_slice %164 {offsets = [0, 0], sizes = [1, 256], strides = [1, 1]} : vector<2x256xf32> to vector<1x256xf32>
      %167 = vector.broadcast %165 : f32 to vector<1x256xf32>
      %168 = arith.mulf %167, %166 : vector<1x256xf32>
      %c1_66 = arith.constant 1 : index
      %c0_67 = arith.constant 0 : index
      %169 = memref.load %arg7[%c1_66, %c0_67] : memref<2x9xf32, #tpu.memory_space<smem>>
      %170 = vector.extract_strided_slice %164 {offsets = [1, 0], sizes = [1, 256], strides = [1, 1]} : vector<2x256xf32> to vector<1x256xf32>
      %171 = vector.broadcast %169 : f32 to vector<1x256xf32>
      %172 = arith.mulf %171, %170 : vector<1x256xf32>
      %173 = arith.addf %168, %172 : vector<1x256xf32>
      %174 = arith.mulf %173, %4 : vector<1x256xf32>
      %175 = arith.addf %163, %174 : vector<1x256xf32>
      %c0_68 = arith.constant 0 : index
      %c112 = arith.constant 112 : index
      %176 = vector.load %arg9[%c0_68, %c112] : memref<2x512xf32, #tpu.memory_space<vmem>>, vector<2x256xf32>
      %c0_69 = arith.constant 0 : index
      %c1_70 = arith.constant 1 : index
      %177 = memref.load %arg7[%c0_69, %c1_70] : memref<2x9xf32, #tpu.memory_space<smem>>
      %178 = vector.extract_strided_slice %176 {offsets = [0, 0], sizes = [1, 256], strides = [1, 1]} : vector<2x256xf32> to vector<1x256xf32>
      %179 = vector.broadcast %177 : f32 to vector<1x256xf32>
      %180 = arith.mulf %179, %178 : vector<1x256xf32>
      %c1_71 = arith.constant 1 : index
      %c1_72 = arith.constant 1 : index
      %181 = memref.load %arg7[%c1_71, %c1_72] : memref<2x9xf32, #tpu.memory_space<smem>>
      %182 = vector.extract_strided_slice %176 {offsets = [1, 0], sizes = [1, 256], strides = [1, 1]} : vector<2x256xf32> to vector<1x256xf32>
      %183 = vector.broadcast %181 : f32 to vector<1x256xf32>
      %184 = arith.mulf %183, %182 : vector<1x256xf32>
      %185 = arith.addf %180, %184 : vector<1x256xf32>
      %186 = arith.addf %175, %185 : vector<1x256xf32>
      %c0_73 = arith.constant 0 : index
      %c113 = arith.constant 113 : index
      %187 = vector.load %arg9[%c0_73, %c113] : memref<2x512xf32, #tpu.memory_space<vmem>>, vector<2x256xf32>
      %c0_74 = arith.constant 0 : index
      %c2 = arith.constant 2 : index
      %188 = memref.load %arg7[%c0_74, %c2] : memref<2x9xf32, #tpu.memory_space<smem>>
      %189 = vector.extract_strided_slice %187 {offsets = [0, 0], sizes = [1, 256], strides = [1, 1]} : vector<2x256xf32> to vector<1x256xf32>
      %190 = vector.broadcast %188 : f32 to vector<1x256xf32>
      %191 = arith.mulf %190, %189 : vector<1x256xf32>
      %c1_75 = arith.constant 1 : index
      %c2_76 = arith.constant 2 : index
      %192 = memref.load %arg7[%c1_75, %c2_76] : memref<2x9xf32, #tpu.memory_space<smem>>
      %193 = vector.extract_strided_slice %187 {offsets = [1, 0], sizes = [1, 256], strides = [1, 1]} : vector<2x256xf32> to vector<1x256xf32>
      %194 = vector.broadcast %192 : f32 to vector<1x256xf32>
      %195 = arith.mulf %194, %193 : vector<1x256xf32>
      %196 = arith.addf %191, %195 : vector<1x256xf32>
      %197 = arith.mulf %196, %5 : vector<1x256xf32>
      %198 = arith.addf %186, %197 : vector<1x256xf32>
      %c0_77 = arith.constant 0 : index
      %c127 = arith.constant 127 : index
      %199 = vector.load %arg9[%c0_77, %c127] : memref<2x512xf32, #tpu.memory_space<vmem>>, vector<2x256xf32>
      %c0_78 = arith.constant 0 : index
      %c3 = arith.constant 3 : index
      %200 = memref.load %arg7[%c0_78, %c3] : memref<2x9xf32, #tpu.memory_space<smem>>
      %201 = vector.extract_strided_slice %199 {offsets = [0, 0], sizes = [1, 256], strides = [1, 1]} : vector<2x256xf32> to vector<1x256xf32>
      %202 = vector.broadcast %200 : f32 to vector<1x256xf32>
      %203 = arith.mulf %202, %201 : vector<1x256xf32>
      %c1_79 = arith.constant 1 : index
      %c3_80 = arith.constant 3 : index
      %204 = memref.load %arg7[%c1_79, %c3_80] : memref<2x9xf32, #tpu.memory_space<smem>>
      %205 = vector.extract_strided_slice %199 {offsets = [1, 0], sizes = [1, 256], strides = [1, 1]} : vector<2x256xf32> to vector<1x256xf32>
      %206 = vector.broadcast %204 : f32 to vector<1x256xf32>
      %207 = arith.mulf %206, %205 : vector<1x256xf32>
      %208 = arith.addf %203, %207 : vector<1x256xf32>
      %209 = arith.mulf %208, %4 : vector<1x256xf32>
      %210 = arith.addf %198, %209 : vector<1x256xf32>
      %c0_81 = arith.constant 0 : index
      %c128_82 = arith.constant 128 : index
      %211 = vector.load %arg9[%c0_81, %c128_82] : memref<2x512xf32, #tpu.memory_space<vmem>>, vector<2x256xf32>
      %c0_83 = arith.constant 0 : index
      %c4 = arith.constant 4 : index
      %212 = memref.load %arg7[%c0_83, %c4] : memref<2x9xf32, #tpu.memory_space<smem>>
      %213 = vector.extract_strided_slice %211 {offsets = [0, 0], sizes = [1, 256], strides = [1, 1]} : vector<2x256xf32> to vector<1x256xf32>
      %214 = vector.broadcast %212 : f32 to vector<1x256xf32>
      %215 = arith.mulf %214, %213 : vector<1x256xf32>
      %c1_84 = arith.constant 1 : index
      %c4_85 = arith.constant 4 : index
      %216 = memref.load %arg7[%c1_84, %c4_85] : memref<2x9xf32, #tpu.memory_space<smem>>
      %217 = vector.extract_strided_slice %211 {offsets = [1, 0], sizes = [1, 256], strides = [1, 1]} : vector<2x256xf32> to vector<1x256xf32>
      %218 = vector.broadcast %216 : f32 to vector<1x256xf32>
      %219 = arith.mulf %218, %217 : vector<1x256xf32>
      %220 = arith.addf %215, %219 : vector<1x256xf32>
      %221 = arith.addf %210, %220 : vector<1x256xf32>
      %c0_86 = arith.constant 0 : index
      %c129 = arith.constant 129 : index
      %222 = vector.load %arg9[%c0_86, %c129] : memref<2x512xf32, #tpu.memory_space<vmem>>, vector<2x256xf32>
      %c0_87 = arith.constant 0 : index
      %c5 = arith.constant 5 : index
      %223 = memref.load %arg7[%c0_87, %c5] : memref<2x9xf32, #tpu.memory_space<smem>>
      %224 = vector.extract_strided_slice %222 {offsets = [0, 0], sizes = [1, 256], strides = [1, 1]} : vector<2x256xf32> to vector<1x256xf32>
      %225 = vector.broadcast %223 : f32 to vector<1x256xf32>
      %226 = arith.mulf %225, %224 : vector<1x256xf32>
      %c1_88 = arith.constant 1 : index
      %c5_89 = arith.constant 5 : index
      %227 = memref.load %arg7[%c1_88, %c5_89] : memref<2x9xf32, #tpu.memory_space<smem>>
      %228 = vector.extract_strided_slice %222 {offsets = [1, 0], sizes = [1, 256], strides = [1, 1]} : vector<2x256xf32> to vector<1x256xf32>
      %229 = vector.broadcast %227 : f32 to vector<1x256xf32>
      %230 = arith.mulf %229, %228 : vector<1x256xf32>
      %231 = arith.addf %226, %230 : vector<1x256xf32>
      %232 = arith.mulf %231, %5 : vector<1x256xf32>
      %233 = arith.addf %221, %232 : vector<1x256xf32>
      %c0_90 = arith.constant 0 : index
      %c143 = arith.constant 143 : index
      %234 = vector.load %arg9[%c0_90, %c143] : memref<2x512xf32, #tpu.memory_space<vmem>>, vector<2x256xf32>
      %c0_91 = arith.constant 0 : index
      %c6 = arith.constant 6 : index
      %235 = memref.load %arg7[%c0_91, %c6] : memref<2x9xf32, #tpu.memory_space<smem>>
      %236 = vector.extract_strided_slice %234 {offsets = [0, 0], sizes = [1, 256], strides = [1, 1]} : vector<2x256xf32> to vector<1x256xf32>
      %237 = vector.broadcast %235 : f32 to vector<1x256xf32>
      %238 = arith.mulf %237, %236 : vector<1x256xf32>
      %c1_92 = arith.constant 1 : index
      %c6_93 = arith.constant 6 : index
      %239 = memref.load %arg7[%c1_92, %c6_93] : memref<2x9xf32, #tpu.memory_space<smem>>
      %240 = vector.extract_strided_slice %234 {offsets = [1, 0], sizes = [1, 256], strides = [1, 1]} : vector<2x256xf32> to vector<1x256xf32>
      %241 = vector.broadcast %239 : f32 to vector<1x256xf32>
      %242 = arith.mulf %241, %240 : vector<1x256xf32>
      %243 = arith.addf %238, %242 : vector<1x256xf32>
      %244 = arith.mulf %243, %4 : vector<1x256xf32>
      %245 = arith.addf %233, %244 : vector<1x256xf32>
      %c0_94 = arith.constant 0 : index
      %c144 = arith.constant 144 : index
      %246 = vector.load %arg9[%c0_94, %c144] : memref<2x512xf32, #tpu.memory_space<vmem>>, vector<2x256xf32>
      %c0_95 = arith.constant 0 : index
      %c7 = arith.constant 7 : index
      %247 = memref.load %arg7[%c0_95, %c7] : memref<2x9xf32, #tpu.memory_space<smem>>
      %248 = vector.extract_strided_slice %246 {offsets = [0, 0], sizes = [1, 256], strides = [1, 1]} : vector<2x256xf32> to vector<1x256xf32>
      %249 = vector.broadcast %247 : f32 to vector<1x256xf32>
      %250 = arith.mulf %249, %248 : vector<1x256xf32>
      %c1_96 = arith.constant 1 : index
      %c7_97 = arith.constant 7 : index
      %251 = memref.load %arg7[%c1_96, %c7_97] : memref<2x9xf32, #tpu.memory_space<smem>>
      %252 = vector.extract_strided_slice %246 {offsets = [1, 0], sizes = [1, 256], strides = [1, 1]} : vector<2x256xf32> to vector<1x256xf32>
      %253 = vector.broadcast %251 : f32 to vector<1x256xf32>
      %254 = arith.mulf %253, %252 : vector<1x256xf32>
      %255 = arith.addf %250, %254 : vector<1x256xf32>
      %256 = arith.addf %245, %255 : vector<1x256xf32>
      %c0_98 = arith.constant 0 : index
      %c145 = arith.constant 145 : index
      %257 = vector.load %arg9[%c0_98, %c145] : memref<2x512xf32, #tpu.memory_space<vmem>>, vector<2x256xf32>
      %c0_99 = arith.constant 0 : index
      %c8 = arith.constant 8 : index
      %258 = memref.load %arg7[%c0_99, %c8] : memref<2x9xf32, #tpu.memory_space<smem>>
      %259 = vector.extract_strided_slice %257 {offsets = [0, 0], sizes = [1, 256], strides = [1, 1]} : vector<2x256xf32> to vector<1x256xf32>
      %260 = vector.broadcast %258 : f32 to vector<1x256xf32>
      %261 = arith.mulf %260, %259 : vector<1x256xf32>
      %c1_100 = arith.constant 1 : index
      %c8_101 = arith.constant 8 : index
      %262 = memref.load %arg7[%c1_100, %c8_101] : memref<2x9xf32, #tpu.memory_space<smem>>
      %263 = vector.extract_strided_slice %257 {offsets = [1, 0], sizes = [1, 256], strides = [1, 1]} : vector<2x256xf32> to vector<1x256xf32>
      %264 = vector.broadcast %262 : f32 to vector<1x256xf32>
      %265 = arith.mulf %264, %263 : vector<1x256xf32>
      %266 = arith.addf %261, %265 : vector<1x256xf32>
      %267 = arith.mulf %266, %5 : vector<1x256xf32>
      %268 = arith.addf %256, %267 : vector<1x256xf32>
      %269 = arith.negf %268 : vector<1x256xf32>
      %270 = math.exp %269 : vector<1x256xf32>
      %cst_102 = arith.constant 1.000000e+00 : f32
      %271 = vector.broadcast %cst_102 : f32 to vector<1x256xf32>
      %272 = arith.addf %271, %270 : vector<1x256xf32>
      %273 = arith.divf %271, %272 : vector<1x256xf32>
      %274 = vector.shape_cast %88 : vector<8x16xf32> to vector<8x16x1xf32>
      %275 = vector.broadcast %274 : vector<8x16x1xf32> to vector<8x16x256xf32>
      %276 = arith.mulf %15, %275 : vector<8x16x256xf32>
      %277 = vector.shape_cast %273 : vector<1x256xf32> to vector<1x1x256xf32>
      %278 = vector.broadcast %277 : vector<1x1x256xf32> to vector<8x16x256xf32>
      %279 = arith.mulf %276, %278 : vector<8x16x256xf32>
      %cst_103 = arith.constant 0.000000e+00 : f32
      %280 = vector.broadcast %cst_103 : f32 to vector<8x16x256xf32>
      %281 = arith.maximumf %279, %280 : vector<8x16x256xf32>
      %282 = arith.index_cast %12 : i32 to index
      %c0_104 = arith.constant 0 : index
      %c0_105 = arith.constant 0 : index
      %c0_106 = arith.constant 0 : index
      %283 = vector.load %arg8[%282, %c0_104, %c0_105, %c0_106] : memref<2x8x16x256xf32, #tpu.memory_space<vmem>>, vector<1x8x16x256xf32>
      %284 = vector.shape_cast %283 : vector<1x8x16x256xf32> to vector<8x16x256xf32>
      %285 = vector.shape_cast %281 : vector<8x16x256xf32> to vector<1x8x16x256xf32>
      tpu.vector_store %arg8[%282, %c0_104, %c0_105, %c0_106], %285 {strides = array<i32>} : memref<2x8x16x256xf32, #tpu.memory_space<vmem>>, vector<1x8x16x256xf32>,
    }
    %c2_i32_14 = arith.constant 2 : i32
    return
  }
  func.func @transform_0(%arg0: i32) -> (i32, i32, i32, i32) {
    %c0_i32 = arith.constant 0 : i32
    %c0_i32_0 = arith.constant 0 : i32
    %c0_i32_1 = arith.constant 0 : i32
    %c0_i32_2 = arith.constant 0 : i32
    return %arg0, %c0_i32, %c0_i32_0, %c0_i32_1 : i32, i32, i32, i32
  }
  func.func @transform_1(%arg0: i32) -> (i32, i32) {
    %c0_i32 = arith.constant 0 : i32
    %c0_i32_0 = arith.constant 0 : i32
    %c0_i32_1 = arith.constant 0 : i32
    return %c0_i32, %c0_i32_0 : i32, i32
  }
  func.func @transform_2(%arg0: i32) -> (i32, i32) {
    %c0_i32 = arith.constant 0 : i32
    %c0_i32_0 = arith.constant 0 : i32
    %c0_i32_1 = arith.constant 0 : i32
    return %c0_i32, %c0_i32_0 : i32, i32
  }
  func.func @transform_3(%arg0: i32) -> (i32, i32) {
    %c0_i32 = arith.constant 0 : i32
    %c0_i32_0 = arith.constant 0 : i32
    %c0_i32_1 = arith.constant 0 : i32
    return %c0_i32, %c0_i32_0 : i32, i32
  }
  func.func @transform_4(%arg0: i32) -> (i32, i32) {
    %c0_i32 = arith.constant 0 : i32
    %c0_i32_0 = arith.constant 0 : i32
    %c0_i32_1 = arith.constant 0 : i32
    return %c0_i32, %c0_i32_0 : i32, i32
  }
  func.func @transform_5(%arg0: i32) -> (i32, i32) {
    %c0_i32 = arith.constant 0 : i32
    %c0_i32_0 = arith.constant 0 : i32
    %c0_i32_1 = arith.constant 0 : i32
    return %c0_i32, %c0_i32_0 : i32, i32
  }
  func.func @transform_6(%arg0: i32) -> (i32, i32) {
    %c0_i32 = arith.constant 0 : i32
    %c0_i32_0 = arith.constant 0 : i32
    %c0_i32_1 = arith.constant 0 : i32
    return %c0_i32, %c0_i32_0 : i32, i32
  }
  func.func @transform_7(%arg0: i32) -> (i32, i32, i32, i32) {
    %c0_i32 = arith.constant 0 : i32
    %c0_i32_0 = arith.constant 0 : i32
    %c0_i32_1 = arith.constant 0 : i32
    %c0_i32_2 = arith.constant 0 : i32
    return %arg0, %c0_i32, %c0_i32_0, %c0_i32_1 : i32, i32, i32, i32
  }
}

</mosaic_0001>

<llo_original>
// kernel: tpu_custom_call.1
$region0: #{tpu_custom_call.1}
  #allocation0 [shape = 'u32[]', space=smem, size = 0x4, offset = 0x4, fixed_abs, tag = 'smem constant byte address 0x4 - core index']
  #allocation1 [shape = 'u32[144,128]{1,0:T(1,128)}', space=vmem, size = 0x12000, scoped, tag = 'internal scratch']
  #allocation2 [shape = 'f32[2,512]{1,0:T(2,128)}', space=vmem, size = 0x1000, scoped, tag = 'scratch operand']
  %s0 = inlined_call_operand.hbm [shape: f32[2,8,16,256], index: 0, kind: input, shape index: {}]
  %s1 = inlined_call_operand.vmem [shape: f32[8,2], index: 1, kind: input, shape index: {}]
  %s2 = inlined_call_operand.vmem [shape: f32[8,2], index: 2, kind: input, shape index: {}]
  %s3 = inlined_call_operand.vmem [shape: f32[4,16], index: 3, kind: input, shape index: {}]
  %s4 = inlined_call_operand.vmem [shape: f32[4,16], index: 4, kind: input, shape index: {}]
  %s5 = inlined_call_operand.vmem [shape: f32[2,256], index: 5, kind: input, shape index: {}]
  %s6 = inlined_call_operand.vmem [shape: f32[2,9], index: 6, kind: input, shape index: {}]
  %s7 = inlined_call_operand.hbm [shape: f32[2,8,16,256], index: 7, kind: output, shape index: {}]
  %s8 = sld [smem:[#allocation0]]
  $region53: #{tpu_custom_call.1} parent=0
    _
  %s10 = ssub.s32 1, %s8
  %s11 = scalar_select 0, %s10, %s8
  $region1: #{tpu_custom_call.1} parent=0
    #allocation3 [shape = 'u8[262144]{0}', space=vmem, size = 0x40000, scoped, tag = 'input window, operand 0, single buffered']
    #allocation4 [shape = 's32[1]{0}', space=sflag, size = 0x4, scoped, tag = 'scoped memory for tpu_custom_call.1']
    #allocation5 [shape = 's32[1]{0}', space=sflag, size = 0x4, scoped, tag = 'scoped memory for tpu_custom_call.1']
    #allocation6 [shape = 's32[1]{0}', space=sflag, size = 0x4, scoped, tag = 'scoped memory for tpu_custom_call.1']
    #allocation7 [shape = 'u8[1024]{0}', space=smem, size = 0x400, scoped, tag = 'input window, operand 6, single buffered']
    #allocation8 [shape = 'u8[262144]{0}', space=vmem, size = 0x40000, scoped, tag = 'output window, operand 0, single buffered']
    %12 = vsyncpa [#allocation4], 0
    %13 = vsyncpa [#allocation6], 0
    %14 = vsyncpa [#allocation5], 0
    // Predicated region
    $region2: #{tpu_custom_call.1} parent=1 // pred_check
      _
    $region3: #{tpu_custom_call.1} parent=1 // pred_check_branch
      %16 = sbr.rel (0) target = $region5
    $region4: #{tpu_custom_call.1} parent=1 // pred_region
      %s18 = ssub.s32 8192, 8192
      %19 = vsyncadd [#allocation4], %s18
      %s20 = sshll.u32 [#allocation3], 4
      %s21 = int_to_ptr.vmem [resolvable:$true] %s20
      %26 = dma.hbm_to_vmem [thread:$0]  %s0, 8192, %s21, [#allocation4], 256, 256, 16
    $region5: #{tpu_custom_call.1} parent=1 // pred_fallthru
      _
    // Predicated region
    $region6: #{tpu_custom_call.1} parent=1 // pred_check
      _
    $region7: #{tpu_custom_call.1} parent=1 // pred_check_branch
      %28 = sbr.rel (0) target = $region9
    $region8: #{tpu_custom_call.1} parent=1 // pred_region
      _
    $region9: #{tpu_custom_call.1} parent=1 // pred_fallthru
      _
    // Predicated region
    $region10: #{tpu_custom_call.1} parent=1 // pred_check
      _
    $region11: #{tpu_custom_call.1} parent=1 // pred_check_branch
      %30 = sbr.rel (0) target = $region13
    $region12: #{tpu_custom_call.1} parent=1 // pred_region
      _
    $region13: #{tpu_custom_call.1} parent=1 // pred_fallthru
      _
    // Predicated region
    $region14: #{tpu_custom_call.1} parent=1 // pred_check
      _
    $region15: #{tpu_custom_call.1} parent=1 // pred_check_branch
      %32 = sbr.rel (0) target = $region17
    $region16: #{tpu_custom_call.1} parent=1 // pred_region
      _
    $region17: #{tpu_custom_call.1} parent=1 // pred_fallthru
      _
    // Predicated region
    $region18: #{tpu_custom_call.1} parent=1 // pred_check
      _
    $region19: #{tpu_custom_call.1} parent=1 // pred_check_branch
      %34 = sbr.rel (0) target = $region21
    $region20: #{tpu_custom_call.1} parent=1 // pred_region
      _
    $region21: #{tpu_custom_call.1} parent=1 // pred_fallthru
      _
    // Predicated region
    $region22: #{tpu_custom_call.1} parent=1 // pred_check
      _
    $region23: #{tpu_custom_call.1} parent=1 // pred_check_branch
      %36 = sbr.rel (0) target = $region25
    $region24: #{tpu_custom_call.1} parent=1 // pred_region
      _
    $region25: #{tpu_custom_call.1} parent=1 // pred_fallthru
      _
    // Predicated region
    $region26: #{tpu_custom_call.1} parent=1 // pred_check
      _
    $region27: #{tpu_custom_call.1} parent=1 // pred_check_branch
      %38 = sbr.rel (0) target = $region29
    $region28: #{tpu_custom_call.1} parent=1 // pred_region
      %s40 = ssub.s32 32, 32
      %41 = vsyncadd [#allocation6], %s40
      %s43 = sshll.u32 %s6, 4
      %s44 = int_to_ptr.vmem [resolvable:$true] %s43
      %46 = dma.vmem_to_smem %s44, 32, [#allocation7], [#allocation6]
    $region29: #{tpu_custom_call.1} parent=1 // pred_fallthru
      _
    // Predicated region
    $region30: #{tpu_custom_call.1} parent=1 // pred_check
      _
    $region31: #{tpu_custom_call.1} parent=1 // pred_check_branch
      %48 = sbr.rel (0) target = $region33
    $region32: #{tpu_custom_call.1} parent=1 // pred_region
      %49 = dma.done [#allocation4], 8192
    $region33: #{tpu_custom_call.1} parent=1 // pred_fallthru
      _
    // Predicated region
    $region34: #{tpu_custom_call.1} parent=1 // pred_check
      _
    $region35: #{tpu_custom_call.1} parent=1 // pred_check_branch
      %51 = sbr.rel (0) target = $region37
    $region36: #{tpu_custom_call.1} parent=1 // pred_region
      %52 = dma.done [#allocation6], 32
    $region37: #{tpu_custom_call.1} parent=1 // pred_fallthru
      _
    %53 = sfence
    %v54 = vld [vmem:[%s1] sm:$0xff]
    %v55 = vld [vmem:[%s2] sm:$0xff]
    %v56 = vld [vmem:[%s3] sm:$0xf]
    %v57 = vld [vmem:[%s4] sm:$0xf]
    %v58 = vld [vmem:[%s5] ss:$2 sm:$0x3]
    %s59 = scalar_lea.vmem %s5, 1
    %v60 = vld [vmem:[%s59] ss:$2 sm:$0x3]
    %61 = vst [vmem:[#allocation2] sm:$0x3] 0.0
    %62 = vst [vmem:[#allocation2 + $0x6] sm:$0x3] 0.0
    loop: start=0, step=1, limit=2
    $region38: #{tpu_custom_call.1} parent=1 // loop_pre_header
      _
    $region39: #{tpu_custom_call.1} parent=1 // loop_header
      %s64 = sphi 0, %s68
      %p65 = scmp.ge.s32.totalorder %s64, 2
    $region40: #{tpu_custom_call.1} parent=1 // loop_header_branch
      %67 = sbr.rel (%p65) target = $region44
    $region41: #{tpu_custom_call.1} parent=1 // loop_body
      %s69 = smul.u32 %s64, 32
      %s70 = smul.addr %s69, 8
      %s71 = scalar_lea.vmem [#allocation3], %s70
      %v72 = vld [vmem:[%s71] sm:$0xff]
      %v73 = vld [vmem:[%s71 + $0x8] sm:$0xff]
      %v74 = vld [vmem:[%s71 + $0x10] sm:$0xff]
      %v75 = vld [vmem:[%s71 + $0x18] sm:$0xff]
      %v76 = vld [vmem:[%s71 + $0x20] sm:$0xff]
      %v77 = vld [vmem:[%s71 + $0x28] sm:$0xff]
      %v78 = vld [vmem:[%s71 + $0x30] sm:$0xff]
      %v79 = vld [vmem:[%s71 + $0x38] sm:$0xff]
      %v80 = vld [vmem:[%s71 + $0x40] sm:$0xff]
      %v81 = vld [vmem:[%s71 + $0x48] sm:$0xff]
      %v82 = vld [vmem:[%s71 + $0x50] sm:$0xff]
      %v83 = vld [vmem:[%s71 + $0x58] sm:$0xff]
      %v84 = vld [vmem:[%s71 + $0x60] sm:$0xff]
      %v85 = vld [vmem:[%s71 + $0x68] sm:$0xff]
      %v86 = vld [vmem:[%s71 + $0x70] sm:$0xff]
      %v87 = vld [vmem:[%s71 + $0x78] sm:$0xff]
      %v88 = vld [vmem:[%s71 + $0x80] sm:$0xff]
      %v89 = vld [vmem:[%s71 + $0x88] sm:$0xff]
      %v90 = vld [vmem:[%s71 + $0x90] sm:$0xff]
      %v91 = vld [vmem:[%s71 + $0x98] sm:$0xff]
      %v92 = vld [vmem:[%s71 + $0xa0] sm:$0xff]
      %v93 = vld [vmem:[%s71 + $0xa8] sm:$0xff]
      %v94 = vld [vmem:[%s71 + $0xb0] sm:$0xff]
      %v95 = vld [vmem:[%s71 + $0xb8] sm:$0xff]
      %v96 = vld [vmem:[%s71 + $0xc0] sm:$0xff]
      %v97 = vld [vmem:[%s71 + $0xc8] sm:$0xff]
      %v98 = vld [vmem:[%s71 + $0xd0] sm:$0xff]
      %v99 = vld [vmem:[%s71 + $0xd8] sm:$0xff]
      %v100 = vld [vmem:[%s71 + $0xe0] sm:$0xff]
      %v101 = vld [vmem:[%s71 + $0xe8] sm:$0xff]
      %v102 = vld [vmem:[%s71 + $0xf0] sm:$0xff]
      %v103 = vld [vmem:[%s71 + $0xf8] sm:$0xff]
      %v104 = vadd.f32 %v72, %v73
      %105 = vadd.xlane.f32.xlu0 %v104
      %v106 = vpop.xlane.xlu0 %105
      %v107 = vadd.f32 %v74, %v75
      %108 = vadd.xlane.f32.xlu0 %v107
      %v109 = vpop.xlane.xlu0 %108
      %v110 = vadd.f32 %v76, %v77
      %111 = vadd.xlane.f32.xlu0 %v110
      %v112 = vpop.xlane.xlu0 %111
      %v113 = vadd.f32 %v78, %v79
      %114 = vadd.xlane.f32.xlu0 %v113
      %v115 = vpop.xlane.xlu0 %114
      %v116 = vadd.f32 %v80, %v81
      %117 = vadd.xlane.f32.xlu0 %v116
      %v118 = vpop.xlane.xlu0 %117
      %v119 = vadd.f32 %v82, %v83
      %120 = vadd.xlane.f32.xlu0 %v119
      %v121 = vpop.xlane.xlu0 %120
      %v122 = vadd.f32 %v84, %v85
      %123 = vadd.xlane.f32.xlu0 %v122
      %v124 = vpop.xlane.xlu0 %123
      %v125 = vadd.f32 %v86, %v87
      %126 = vadd.xlane.f32.xlu0 %v125
      %v127 = vpop.xlane.xlu0 %126
      %v128 = vadd.f32 %v88, %v89
      %129 = vadd.xlane.f32.xlu0 %v128
      %v130 = vpop.xlane.xlu0 %129
      %v131 = vadd.f32 %v90, %v91
      %132 = vadd.xlane.f32.xlu0 %v131
      %v133 = vpop.xlane.xlu0 %132
      %v134 = vadd.f32 %v92, %v93
      %135 = vadd.xlane.f32.xlu0 %v134
      %v136 = vpop.xlane.xlu0 %135
      %v137 = vadd.f32 %v94, %v95
      %138 = vadd.xlane.f32.xlu0 %v137
      %v139 = vpop.xlane.xlu0 %138
      %v140 = vadd.f32 %v96, %v97
      %141 = vadd.xlane.f32.xlu0 %v140
      %v142 = vpop.xlane.xlu0 %141
      %v143 = vadd.f32 %v98, %v99
      %144 = vadd.xlane.f32.xlu0 %v143
      %v145 = vpop.xlane.xlu0 %144
      %v146 = vadd.f32 %v100, %v101
      %147 = vadd.xlane.f32.xlu0 %v146
      %v148 = vpop.xlane.xlu0 %147
      %v149 = vadd.f32 %v102, %v103
      %150 = vadd.xlane.f32.xlu0 %v149
      %v151 = vpop.xlane.xlu0 %150
      %v152 = vmax.f32 %v72, %v73
      %153 = vmax.xlane.f32.xlu0 %v152
      %v154 = vpop.xlane.xlu0 %153
      %v155 = vmax.f32 %v74, %v75
      %156 = vmax.xlane.f32.xlu0 %v155
      %v157 = vpop.xlane.xlu0 %156
      %v158 = vmax.f32 %v76, %v77
      %159 = vmax.xlane.f32.xlu0 %v158
      %v160 = vpop.xlane.xlu0 %159
      %v161 = vmax.f32 %v78, %v79
      %162 = vmax.xlane.f32.xlu0 %v161
      %v163 = vpop.xlane.xlu0 %162
      %v164 = vmax.f32 %v80, %v81
      %165 = vmax.xlane.f32.xlu0 %v164
      %v166 = vpop.xlane.xlu0 %165
      %v167 = vmax.f32 %v82, %v83
      %168 = vmax.xlane.f32.xlu0 %v167
      %v169 = vpop.xlane.xlu0 %168
      %v170 = vmax.f32 %v84, %v85
      %171 = vmax.xlane.f32.xlu0 %v170
      %v172 = vpop.xlane.xlu0 %171
      %v173 = vmax.f32 %v86, %v87
      %174 = vmax.xlane.f32.xlu0 %v173
      %v175 = vpop.xlane.xlu0 %174
      %v176 = vmax.f32 %v88, %v89
      %177 = vmax.xlane.f32.xlu0 %v176
      %v178 = vpop.xlane.xlu0 %177
      %v179 = vmax.f32 %v90, %v91
      %180 = vmax.xlane.f32.xlu0 %v179
      %v181 = vpop.xlane.xlu0 %180
      %v182 = vmax.f32 %v92, %v93
      %183 = vmax.xlane.f32.xlu0 %v182
      %v184 = vpop.xlane.xlu0 %183
      %v185 = vmax.f32 %v94, %v95
      %186 = vmax.xlane.f32.xlu0 %v185
      %v187 = vpop.xlane.xlu0 %186
      %v188 = vmax.f32 %v96, %v97
      %189 = vmax.xlane.f32.xlu0 %v188
      %v190 = vpop.xlane.xlu0 %189
      %v191 = vmax.f32 %v98, %v99
      %192 = vmax.xlane.f32.xlu0 %v191
      %v193 = vpop.xlane.xlu0 %192
      %v194 = vmax.f32 %v100, %v101
      %195 = vmax.xlane.f32.xlu0 %v194
      %v196 = vpop.xlane.xlu0 %195
      %v197 = vmax.f32 %v102, %v103
      %198 = vmax.xlane.f32.xlu0 %v197
      %v199 = vpop.xlane.xlu0 %198
      %v216 = vlaneseq
      %v217 = vand.u32 %v216, 127
      %v218 = vlaneseq
      %v219 = vshrl.u32 %v218, 7
      %v220 = vsub.s32 %v217, %v219
      %v221 = vrot.slane %v106, %v220
      %v222 = vadd.s32 %v217, 4294967288
      %v223 = vlaneseq
      %v224 = vshrl.u32 %v223, 7
      %v225 = vsub.s32 %v222, %v224
      %v226 = vrot.slane %v109, %v225
      %vm227 = vcmask 130112
      %v228 = vsel %vm227, %v226, %v221
      %v229 = vlaneseq
      %v230 = vshrl.u32 %v229, 7
      %v231 = vsub.s32 %v217, %v230
      %v232 = vrot.slane %v112, %v231
      %v233 = vlaneseq
      %v234 = vshrl.u32 %v233, 7
      %v235 = vsub.s32 %v222, %v234
      %v236 = vrot.slane %v115, %v235
      %v237 = vsel %vm227, %v236, %v232
      %v238 = vlaneseq
      %v239 = vshrl.u32 %v238, 7
      %v240 = vsub.s32 %v217, %v239
      %v241 = vrot.slane %v118, %v240
      %v242 = vlaneseq
      %v243 = vshrl.u32 %v242, 7
      %v244 = vsub.s32 %v222, %v243
      %v245 = vrot.slane %v121, %v244
      %v246 = vsel %vm227, %v245, %v241
      %v247 = vlaneseq
      %v248 = vshrl.u32 %v247, 7
      %v249 = vsub.s32 %v217, %v248
      %v250 = vrot.slane %v124, %v249
      %v251 = vlaneseq
      %v252 = vshrl.u32 %v251, 7
      %v253 = vsub.s32 %v222, %v252
      %v254 = vrot.slane %v127, %v253
      %v255 = vsel %vm227, %v254, %v250
      %v256 = vlaneseq
      %v257 = vshrl.u32 %v256, 7
      %v258 = vsub.s32 %v217, %v257
      %v259 = vrot.slane %v130, %v258
      %v260 = vlaneseq
      %v261 = vshrl.u32 %v260, 7
      %v262 = vsub.s32 %v222, %v261
      %v263 = vrot.slane %v133, %v262
      %v264 = vsel %vm227, %v263, %v259
      %v265 = vlaneseq
      %v266 = vshrl.u32 %v265, 7
      %v267 = vsub.s32 %v217, %v266
      %v268 = vrot.slane %v136, %v267
      %v269 = vlaneseq
      %v270 = vshrl.u32 %v269, 7
      %v271 = vsub.s32 %v222, %v270
      %v272 = vrot.slane %v139, %v271
      %v273 = vsel %vm227, %v272, %v268
      %v274 = vlaneseq
      %v275 = vshrl.u32 %v274, 7
      %v276 = vsub.s32 %v217, %v275
      %v277 = vrot.slane %v142, %v276
      %v278 = vlaneseq
      %v279 = vshrl.u32 %v278, 7
      %v280 = vsub.s32 %v222, %v279
      %v281 = vrot.slane %v145, %v280
      %v282 = vsel %vm227, %v281, %v277
      %v283 = vlaneseq
      %v284 = vshrl.u32 %v283, 7
      %v285 = vsub.s32 %v217, %v284
      %v286 = vrot.slane %v148, %v285
      %v287 = vlaneseq
      %v288 = vshrl.u32 %v287, 7
      %v289 = vsub.s32 %v222, %v288
      %v290 = vrot.slane %v151, %v289
      %v291 = vsel %vm227, %v290, %v286
      %vm292 = vcmask 1041409
      %v293 = vsel %vm292, %v237, %v228
      %vm294 = vcmask 1042434
      %v295 = vsel %vm294, %v246, %v293
      %vm296 = vcmask 1043459
      %v297 = vsel %vm296, %v255, %v295
      %vm298 = vcmask 1044484
      %v299 = vsel %vm298, %v264, %v297
      %vm300 = vcmask 1045509
      %v301 = vsel %vm300, %v273, %v299
      %vm302 = vcmask 1046534
      %v303 = vsel %vm302, %v282, %v301
      %vm304 = vcmask 1047559
      %v305 = vsel %vm304, %v291, %v303
      %vm307 = vcmask 130048
      %v308 = vsel %vm307, %v305, 0.0
      %309 = vadd.xlane.f32.xlu0 %v308
      %v310 = vpop.xlane.xlu0 %309
      %v311 = vmul.f32 %v310, 0.00024414063
      %v328 = vlaneseq
      %v329 = vshrl.u32 %v328, 7
      %v330 = vsub.s32 %v217, %v329
      %v331 = vrot.slane %v154, %v330
      %v332 = vlaneseq
      %v333 = vshrl.u32 %v332, 7
      %v334 = vsub.s32 %v222, %v333
      %v335 = vrot.slane %v157, %v334
      %v336 = vsel %vm227, %v335, %v331
      %v337 = vlaneseq
      %v338 = vshrl.u32 %v337, 7
      %v339 = vsub.s32 %v217, %v338
      %v340 = vrot.slane %v160, %v339
      %v341 = vlaneseq
      %v342 = vshrl.u32 %v341, 7
      %v343 = vsub.s32 %v222, %v342
      %v344 = vrot.slane %v163, %v343
      %v345 = vsel %vm227, %v344, %v340
      %v346 = vlaneseq
      %v347 = vshrl.u32 %v346, 7
      %v348 = vsub.s32 %v217, %v347
      %v349 = vrot.slane %v166, %v348
      %v350 = vlaneseq
      %v351 = vshrl.u32 %v350, 7
      %v352 = vsub.s32 %v222, %v351
      %v353 = vrot.slane %v169, %v352
      %v354 = vsel %vm227, %v353, %v349
      %v355 = vlaneseq
      %v356 = vshrl.u32 %v355, 7
      %v357 = vsub.s32 %v217, %v356
      %v358 = vrot.slane %v172, %v357
      %v359 = vlaneseq
      %v360 = vshrl.u32 %v359, 7
      %v361 = vsub.s32 %v222, %v360
      %v362 = vrot.slane %v175, %v361
      %v363 = vsel %vm227, %v362, %v358
      %v364 = vlaneseq
      %v365 = vshrl.u32 %v364, 7
      %v366 = vsub.s32 %v217, %v365
      %v367 = vrot.slane %v178, %v366
      %v368 = vlaneseq
      %v369 = vshrl.u32 %v368, 7
      %v370 = vsub.s32 %v222, %v369
      %v371 = vrot.slane %v181, %v370
      %v372 = vsel %vm227, %v371, %v367
      %v373 = vlaneseq
      %v374 = vshrl.u32 %v373, 7
      %v375 = vsub.s32 %v217, %v374
      %v376 = vrot.slane %v184, %v375
      %v377 = vlaneseq
      %v378 = vshrl.u32 %v377, 7
      %v379 = vsub.s32 %v222, %v378
      %v380 = vrot.slane %v187, %v379
      %v381 = vsel %vm227, %v380, %v376
      %v382 = vlaneseq
      %v383 = vshrl.u32 %v382, 7
      %v384 = vsub.s32 %v217, %v383
      %v385 = vrot.slane %v190, %v384
      %v386 = vlaneseq
      %v387 = vshrl.u32 %v386, 7
      %v388 = vsub.s32 %v222, %v387
      %v389 = vrot.slane %v193, %v388
      %v390 = vsel %vm227, %v389, %v385
      %v391 = vlaneseq
      %v392 = vshrl.u32 %v391, 7
      %v393 = vsub.s32 %v217, %v392
      %v394 = vrot.slane %v196, %v393
      %v395 = vlaneseq
      %v396 = vshrl.u32 %v395, 7
      %v397 = vsub.s32 %v222, %v396
      %v398 = vrot.slane %v199, %v397
      %v399 = vsel %vm227, %v398, %v394
      %v400 = vsel %vm292, %v345, %v336
      %v401 = vsel %vm294, %v354, %v400
      %v402 = vsel %vm296, %v363, %v401
      %v403 = vsel %vm298, %v372, %v402
      %v404 = vsel %vm300, %v381, %v403
      %v405 = vsel %vm302, %v390, %v404
      %v406 = vsel %vm304, %v399, %v405
      %v408 = vsel %vm307, %v406, -inf
      %409 = vmax.xlane.f32.xlu0 %v408
      %v410 = vpop.xlane.xlu0 %409
      %v411 = vmul.f32 %v54, %v311
      %vm412 = vcmask 15360
      %v413 = vsel %vm412, %v411, 0.0
      %v414 = vrot.slane %v413, 4
      %v415 = vadd.f32 %v413, %v414
      %v416 = vrot.slane %v415, 2
      %v417 = vadd.f32 %v415, %v416
      %v418 = vrot.slane %v417, 1
      %v419 = vadd.f32 %v417, %v418
      %v420 = vmax.f32 %v419, 0.0
      %v421 = vmul.f32 %v55, %v420
      %v422 = vsel %vm412, %v421, 0.0
      %423 = vadd.xlane.f32.xlu0 %v422
      %v424 = vpop.xlane.xlu0 %423
      %v425 = vmul.f32 %v54, %v410
      %v426 = vsel %vm412, %v425, 0.0
      %v427 = vrot.slane %v426, 4
      %v428 = vadd.f32 %v426, %v427
      %v429 = vrot.slane %v428, 2
      %v430 = vadd.f32 %v428, %v429
      %v431 = vrot.slane %v430, 1
      %v432 = vadd.f32 %v430, %v431
      %v433 = vmax.f32 %v432, 0.0
      %v434 = vmul.f32 %v55, %v433
      %v435 = vsel %vm412, %v434, 0.0
      %436 = vadd.xlane.f32.xlu0 %v435
      %v437 = vpop.xlane.xlu0 %436
      %v438 = vadd.f32 %v424, %v437
      %v439 = vxor.u32 %v438, 2147483648
      %v440 = vmul.f32 %v439, 1.442695
      %v441 = vpow.pop %v440
      %v442 = vadd.f32 %v441, 1.0
      %v443 = vrcp.pop %v442
      %v444 = vmul.f32 1.0, %v443
      %v445 = vmul.f32 %v444, %v305
      %v446 = vsel %vm307, %v445, 0.0
      %v447 = vrot.slane %v446, 4
      %v448 = vadd.f32 %v446, %v447
      %v449 = vrot.slane %v448, 2
      %v450 = vadd.f32 %v448, %v449
      %v451 = vrot.slane %v450, 1
      %v452 = vadd.f32 %v450, %v451
      %v453 = vmul.f32 %v452, 0.00048828125
      %v454 = vmul.f32 %v444, %v406
      %v455 = vsel %vm307, %v454, -inf
      %v456 = vrot.slane %v455, 4
      %v457 = vmax.f32 %v455, %v456
      %v458 = vrot.slane %v457, 2
      %v459 = vmax.f32 %v457, %v458
      %v460 = vrot.slane %v459, 1
      %v461 = vmax.f32 %v459, %v460
      %v462 = vmul.f32 %v56, %v453
      %vm463 = vcmask 125952
      %v464 = vsel %vm463, %v462, 0.0
      %465 = vadd.xlane.f32.xlu0 %v464
      %v466 = vpop.xlane.xlu0 %465
      %v467 = vmax.f32 %v466, 0.0
      %v468 = vmul.f32 %v57, %v467
      %v469 = vsel %vm463, %v468, 0.0
      %v470 = vrot.slane %v469, 4
      %v471 = vadd.f32 %v469, %v470
      %v472 = vrot.slane %v471, 2
      %v473 = vadd.f32 %v471, %v472
      %v474 = vrot.slane %v473, 1
      %v475 = vadd.f32 %v473, %v474
      %v476 = vmul.f32 %v56, %v461
      %v477 = vsel %vm463, %v476, 0.0
      %478 = vadd.xlane.f32.xlu0 %v477
      %v479 = vpop.xlane.xlu0 %478
      %v480 = vmax.f32 %v479, 0.0
      %v481 = vmul.f32 %v57, %v480
      %v482 = vsel %vm463, %v481, 0.0
      %v483 = vrot.slane %v482, 4
      %v484 = vadd.f32 %v482, %v483
      %v485 = vrot.slane %v484, 2
      %v486 = vadd.f32 %v484, %v485
      %v487 = vrot.slane %v486, 1
      %v488 = vadd.f32 %v486, %v487
      %v489 = vadd.f32 %v475, %v488
      %v490 = vxor.u32 %v489, 2147483648
      %v491 = vmul.f32 %v490, 1.442695
      %v492 = vpow.pop %v491
      %v493 = vadd.f32 %v492, 1.0
      %v494 = vrcp.pop %v493
      %v495 = vmul.f32 1.0, %v494
      %v496 = vmul.f32 %v444, %v495
      %v497 = vlaneseq
      %v498 = vshrl.u32 %v497, 7
      %v499 = vsub.s32 0, %v498
      %v500 = vrot.slane %v496, %v499
      %502 = vbcast.lane.b32.xlu0 %v500, 256
      %v503 = vpop.permute.xlu0 %502
      %s505 = sor.u32 256, 8
      %506 = vbcast.lane.b32.xlu0 %v500, %s505
      %v507 = vpop.permute.xlu0 %506
      %v508 = vmul.f32 %v72, %v503
      %v509 = vmul.f32 %v73, %v503
      %v510 = vmul.f32 %v74, %v507
      %v511 = vmul.f32 %v75, %v507
      %v512 = vadd.f32 %v508, %v510
      %v513 = vrot.slane %v512, 4
      %v514 = vadd.f32 %v512, %v513
      %v515 = vrot.slane %v514, 2
      %v516 = vadd.f32 %v514, %v515
      %v517 = vrot.slane %v516, 1
      %v518 = vadd.f32 %v516, %v517
      %v519 = vadd.f32 %v509, %v511
      %v520 = vrot.slane %v519, 4
      %v521 = vadd.f32 %v519, %v520
      %v522 = vrot.slane %v521, 2
      %v523 = vadd.f32 %v521, %v522
      %v524 = vrot.slane %v523, 1
      %v525 = vadd.f32 %v523, %v524
      %v526 = vmax.f32 %v508, %v510
      %v527 = vrot.slane %v526, 4
      %v528 = vmax.f32 %v526, %v527
      %v529 = vrot.slane %v528, 2
      %v530 = vmax.f32 %v528, %v529
      %v531 = vrot.slane %v530, 1
      %v532 = vmax.f32 %v530, %v531
      %v533 = vmax.f32 %v509, %v511
      %v534 = vrot.slane %v533, 4
      %v535 = vmax.f32 %v533, %v534
      %v536 = vrot.slane %v535, 2
      %v537 = vmax.f32 %v535, %v536
      %v538 = vrot.slane %v537, 1
      %v539 = vmax.f32 %v537, %v538
      %v540 = vlaneseq
      %v541 = vshrl.u32 %v540, 7
      %v542 = vsub.s32 1, %v541
      %v543 = vrot.slane %v496, %v542
      %545 = vbcast.lane.b32.xlu0 %v543, 256
      %v546 = vpop.permute.xlu0 %545
      %s548 = sor.u32 256, 8
      %549 = vbcast.lane.b32.xlu0 %v543, %s548
      %v550 = vpop.permute.xlu0 %549
      %v551 = vmul.f32 %v76, %v546
      %v552 = vmul.f32 %v77, %v546
      %v553 = vmul.f32 %v78, %v550
      %v554 = vmul.f32 %v79, %v550
      %v555 = vadd.f32 %v551, %v553
      %v556 = vrot.slane %v555, 4
      %v557 = vadd.f32 %v555, %v556
      %v558 = vrot.slane %v557, 2
      %v559 = vadd.f32 %v557, %v558
      %v560 = vrot.slane %v559, 1
      %v561 = vadd.f32 %v559, %v560
      %v562 = vadd.f32 %v552, %v554
      %v563 = vrot.slane %v562, 4
      %v564 = vadd.f32 %v562, %v563
      %v565 = vrot.slane %v564, 2
      %v566 = vadd.f32 %v564, %v565
      %v567 = vrot.slane %v566, 1
      %v568 = vadd.f32 %v566, %v567
      %v569 = vadd.f32 %v518, %v561
      %v570 = vadd.f32 %v525, %v568
      %v571 = vmax.f32 %v551, %v553
      %v572 = vrot.slane %v571, 4
      %v573 = vmax.f32 %v571, %v572
      %v574 = vrot.slane %v573, 2
      %v575 = vmax.f32 %v573, %v574
      %v576 = vrot.slane %v575, 1
      %v577 = vmax.f32 %v575, %v576
      %v578 = vmax.f32 %v552, %v554
      %v579 = vrot.slane %v578, 4
      %v580 = vmax.f32 %v578, %v579
      %v581 = vrot.slane %v580, 2
      %v582 = vmax.f32 %v580, %v581
      %v583 = vrot.slane %v582, 1
      %v584 = vmax.f32 %v582, %v583
      %v585 = vmax.f32 %v532, %v577
      %v586 = vmax.f32 %v539, %v584
      %v587 = vlaneseq
      %v588 = vshrl.u32 %v587, 7
      %v589 = vsub.s32 2, %v588
      %v590 = vrot.slane %v496, %v589
      %592 = vbcast.lane.b32.xlu0 %v590, 256
      %v593 = vpop.permute.xlu0 %592
      %s595 = sor.u32 256, 8
      %596 = vbcast.lane.b32.xlu0 %v590, %s595
      %v597 = vpop.permute.xlu0 %596
      %v598 = vmul.f32 %v80, %v593
      %v599 = vmul.f32 %v81, %v593
      %v600 = vmul.f32 %v82, %v597
      %v601 = vmul.f32 %v83, %v597
      %v602 = vadd.f32 %v598, %v600
      %v603 = vrot.slane %v602, 4
      %v604 = vadd.f32 %v602, %v603
      %v605 = vrot.slane %v604, 2
      %v606 = vadd.f32 %v604, %v605
      %v607 = vrot.slane %v606, 1
      %v608 = vadd.f32 %v606, %v607
      %v609 = vadd.f32 %v599, %v601
      %v610 = vrot.slane %v609, 4
      %v611 = vadd.f32 %v609, %v610
      %v612 = vrot.slane %v611, 2
      %v613 = vadd.f32 %v611, %v612
      %v614 = vrot.slane %v613, 1
      %v615 = vadd.f32 %v613, %v614
      %v616 = vadd.f32 %v569, %v608
      %v617 = vadd.f32 %v570, %v615
      %v618 = vmax.f32 %v598, %v600
      %v619 = vrot.slane %v618, 4
      %v620 = vmax.f32 %v618, %v619
      %v621 = vrot.slane %v620, 2
      %v622 = vmax.f32 %v620, %v621
      %v623 = vrot.slane %v622, 1
      %v624 = vmax.f32 %v622, %v623
      %v625 = vmax.f32 %v599, %v601
      %v626 = vrot.slane %v625, 4
      %v627 = vmax.f32 %v625, %v626
      %v628 = vrot.slane %v627, 2
      %v629 = vmax.f32 %v627, %v628
      %v630 = vrot.slane %v629, 1
      %v631 = vmax.f32 %v629, %v630
      %v632 = vmax.f32 %v585, %v624
      %v633 = vmax.f32 %v586, %v631
      %v634 = vlaneseq
      %v635 = vshrl.u32 %v634, 7
      %v636 = vsub.s32 3, %v635
      %v637 = vrot.slane %v496, %v636
      %639 = vbcast.lane.b32.xlu0 %v637, 256
      %v640 = vpop.permute.xlu0 %639
      %s642 = sor.u32 256, 8
      %643 = vbcast.lane.b32.xlu0 %v637, %s642
      %v644 = vpop.permute.xlu0 %643
      %v645 = vmul.f32 %v84, %v640
      %v646 = vmul.f32 %v85, %v640
      %v647 = vmul.f32 %v86, %v644
      %v648 = vmul.f32 %v87, %v644
      %v649 = vadd.f32 %v645, %v647
      %v650 = vrot.slane %v649, 4
      %v651 = vadd.f32 %v649, %v650
      %v652 = vrot.slane %v651, 2
      %v653 = vadd.f32 %v651, %v652
      %v654 = vrot.slane %v653, 1
      %v655 = vadd.f32 %v653, %v654
      %v656 = vadd.f32 %v646, %v648
      %v657 = vrot.slane %v656, 4
      %v658 = vadd.f32 %v656, %v657
      %v659 = vrot.slane %v658, 2
      %v660 = vadd.f32 %v658, %v659
      %v661 = vrot.slane %v660, 1
      %v662 = vadd.f32 %v660, %v661
      %v663 = vadd.f32 %v616, %v655
      %v664 = vadd.f32 %v617, %v662
      %v665 = vmax.f32 %v645, %v647
      %v666 = vrot.slane %v665, 4
      %v667 = vmax.f32 %v665, %v666
      %v668 = vrot.slane %v667, 2
      %v669 = vmax.f32 %v667, %v668
      %v670 = vrot.slane %v669, 1
      %v671 = vmax.f32 %v669, %v670
      %v672 = vmax.f32 %v646, %v648
      %v673 = vrot.slane %v672, 4
      %v674 = vmax.f32 %v672, %v673
      %v675 = vrot.slane %v674, 2
      %v676 = vmax.f32 %v674, %v675
      %v677 = vrot.slane %v676, 1
      %v678 = vmax.f32 %v676, %v677
      %v679 = vmax.f32 %v632, %v671
      %v680 = vmax.f32 %v633, %v678
      %v681 = vlaneseq
      %v682 = vshrl.u32 %v681, 7
      %v683 = vsub.s32 4, %v682
      %v684 = vrot.slane %v496, %v683
      %686 = vbcast.lane.b32.xlu0 %v684, 256
      %v687 = vpop.permute.xlu0 %686
      %s689 = sor.u32 256, 8
      %690 = vbcast.lane.b32.xlu0 %v684, %s689
      %v691 = vpop.permute.xlu0 %690
      %v692 = vmul.f32 %v88, %v687
      %v693 = vmul.f32 %v89, %v687
      %v694 = vmul.f32 %v90, %v691
      %v695 = vmul.f32 %v91, %v691
      %v696 = vadd.f32 %v692, %v694
      %v697 = vrot.slane %v696, 4
      %v698 = vadd.f32 %v696, %v697
      %v699 = vrot.slane %v698, 2
      %v700 = vadd.f32 %v698, %v699
      %v701 = vrot.slane %v700, 1
      %v702 = vadd.f32 %v700, %v701
      %v703 = vadd.f32 %v693, %v695
      %v704 = vrot.slane %v703, 4
      %v705 = vadd.f32 %v703, %v704
      %v706 = vrot.slane %v705, 2
      %v707 = vadd.f32 %v705, %v706
      %v708 = vrot.slane %v707, 1
      %v709 = vadd.f32 %v707, %v708
      %v710 = vadd.f32 %v663, %v702
      %v711 = vadd.f32 %v664, %v709
      %v712 = vmax.f32 %v692, %v694
      %v713 = vrot.slane %v712, 4
      %v714 = vmax.f32 %v712, %v713
      %v715 = vrot.slane %v714, 2
      %v716 = vmax.f32 %v714, %v715
      %v717 = vrot.slane %v716, 1
      %v718 = vmax.f32 %v716, %v717
      %v719 = vmax.f32 %v693, %v695
      %v720 = vrot.slane %v719, 4
      %v721 = vmax.f32 %v719, %v720
      %v722 = vrot.slane %v721, 2
      %v723 = vmax.f32 %v721, %v722
      %v724 = vrot.slane %v723, 1
      %v725 = vmax.f32 %v723, %v724
      %v726 = vmax.f32 %v679, %v718
      %v727 = vmax.f32 %v680, %v725
      %v728 = vlaneseq
      %v729 = vshrl.u32 %v728, 7
      %v730 = vsub.s32 5, %v729
      %v731 = vrot.slane %v496, %v730
      %733 = vbcast.lane.b32.xlu0 %v731, 256
      %v734 = vpop.permute.xlu0 %733
      %s736 = sor.u32 256, 8
      %737 = vbcast.lane.b32.xlu0 %v731, %s736
      %v738 = vpop.permute.xlu0 %737
      %v739 = vmul.f32 %v92, %v734
      %v740 = vmul.f32 %v93, %v734
      %v741 = vmul.f32 %v94, %v738
      %v742 = vmul.f32 %v95, %v738
      %v743 = vadd.f32 %v739, %v741
      %v744 = vrot.slane %v743, 4
      %v745 = vadd.f32 %v743, %v744
      %v746 = vrot.slane %v745, 2
      %v747 = vadd.f32 %v745, %v746
      %v748 = vrot.slane %v747, 1
      %v749 = vadd.f32 %v747, %v748
      %v750 = vadd.f32 %v740, %v742
      %v751 = vrot.slane %v750, 4
      %v752 = vadd.f32 %v750, %v751
      %v753 = vrot.slane %v752, 2
      %v754 = vadd.f32 %v752, %v753
      %v755 = vrot.slane %v754, 1
      %v756 = vadd.f32 %v754, %v755
      %v757 = vadd.f32 %v710, %v749
      %v758 = vadd.f32 %v711, %v756
      %v759 = vmax.f32 %v739, %v741
      %v760 = vrot.slane %v759, 4
      %v761 = vmax.f32 %v759, %v760
      %v762 = vrot.slane %v761, 2
      %v763 = vmax.f32 %v761, %v762
      %v764 = vrot.slane %v763, 1
      %v765 = vmax.f32 %v763, %v764
      %v766 = vmax.f32 %v740, %v742
      %v767 = vrot.slane %v766, 4
      %v768 = vmax.f32 %v766, %v767
      %v769 = vrot.slane %v768, 2
      %v770 = vmax.f32 %v768, %v769
      %v771 = vrot.slane %v770, 1
      %v772 = vmax.f32 %v770, %v771
      %v773 = vmax.f32 %v726, %v765
      %v774 = vmax.f32 %v727, %v772
      %v775 = vlaneseq
      %v776 = vshrl.u32 %v775, 7
      %v777 = vsub.s32 6, %v776
      %v778 = vrot.slane %v496, %v777
      %780 = vbcast.lane.b32.xlu0 %v778, 256
      %v781 = vpop.permute.xlu0 %780
      %s783 = sor.u32 256, 8
      %784 = vbcast.lane.b32.xlu0 %v778, %s783
      %v785 = vpop.permute.xlu0 %784
      %v786 = vmul.f32 %v96, %v781
      %v787 = vmul.f32 %v97, %v781
      %v788 = vmul.f32 %v98, %v785
      %v789 = vmul.f32 %v99, %v785
      %v790 = vadd.f32 %v786, %v788
      %v791 = vrot.slane %v790, 4
      %v792 = vadd.f32 %v790, %v791
      %v793 = vrot.slane %v792, 2
      %v794 = vadd.f32 %v792, %v793
      %v795 = vrot.slane %v794, 1
      %v796 = vadd.f32 %v794, %v795
      %v797 = vadd.f32 %v787, %v789
      %v798 = vrot.slane %v797, 4
      %v799 = vadd.f32 %v797, %v798
      %v800 = vrot.slane %v799, 2
      %v801 = vadd.f32 %v799, %v800
      %v802 = vrot.slane %v801, 1
      %v803 = vadd.f32 %v801, %v802
      %v804 = vadd.f32 %v757, %v796
      %v805 = vadd.f32 %v758, %v803
      %v806 = vmax.f32 %v786, %v788
      %v807 = vrot.slane %v806, 4
      %v808 = vmax.f32 %v806, %v807
      %v809 = vrot.slane %v808, 2
      %v810 = vmax.f32 %v808, %v809
      %v811 = vrot.slane %v810, 1
      %v812 = vmax.f32 %v810, %v811
      %v813 = vmax.f32 %v787, %v789
      %v814 = vrot.slane %v813, 4
      %v815 = vmax.f32 %v813, %v814
      %v816 = vrot.slane %v815, 2
      %v817 = vmax.f32 %v815, %v816
      %v818 = vrot.slane %v817, 1
      %v819 = vmax.f32 %v817, %v818
      %v820 = vmax.f32 %v773, %v812
      %v821 = vmax.f32 %v774, %v819
      %v822 = vlaneseq
      %v823 = vshrl.u32 %v822, 7
      %v824 = vsub.s32 7, %v823
      %v825 = vrot.slane %v496, %v824
      %827 = vbcast.lane.b32.xlu0 %v825, 256
      %v828 = vpop.permute.xlu0 %827
      %s830 = sor.u32 256, 8
      %831 = vbcast.lane.b32.xlu0 %v825, %s830
      %v832 = vpop.permute.xlu0 %831
      %v833 = vmul.f32 %v100, %v828
      %v834 = vmul.f32 %v101, %v828
      %v835 = vmul.f32 %v102, %v832
      %v836 = vmul.f32 %v103, %v832
      %v837 = vadd.f32 %v833, %v835
      %v838 = vrot.slane %v837, 4
      %v839 = vadd.f32 %v837, %v838
      %v840 = vrot.slane %v839, 2
      %v841 = vadd.f32 %v839, %v840
      %v842 = vrot.slane %v841, 1
      %v843 = vadd.f32 %v841, %v842
      %v844 = vadd.f32 %v834, %v836
      %v845 = vrot.slane %v844, 4
      %v846 = vadd.f32 %v844, %v845
      %v847 = vrot.slane %v846, 2
      %v848 = vadd.f32 %v846, %v847
      %v849 = vrot.slane %v848, 1
      %v850 = vadd.f32 %v848, %v849
      %v851 = vadd.f32 %v804, %v843
      %v852 = vadd.f32 %v805, %v850
      %v853 = vmax.f32 %v833, %v835
      %v854 = vrot.slane %v853, 4
      %v855 = vmax.f32 %v853, %v854
      %v856 = vrot.slane %v855, 2
      %v857 = vmax.f32 %v855, %v856
      %v858 = vrot.slane %v857, 1
      %v859 = vmax.f32 %v857, %v858
      %v860 = vmax.f32 %v834, %v836
      %v861 = vrot.slane %v860, 4
      %v862 = vmax.f32 %v860, %v861
      %v863 = vrot.slane %v862, 2
      %v864 = vmax.f32 %v862, %v863
      %v865 = vrot.slane %v864, 1
      %v866 = vmax.f32 %v864, %v865
      %v867 = vmax.f32 %v820, %v859
      %v868 = vmax.f32 %v821, %v866
      %v869 = vmul.f32 %v851, 0.0078125
      %v870 = vmul.f32 %v852, 0.0078125
      %v873 = vcombine.low %v869, %v870
      %v875 = vunpack.c.l.s4 1966171168
      %v876 = vunpack.c.0.s8 %v875
      %v877 = vlaneseq
      %v878 = vshrl.u32 %v877, 7
      %v879 = vsub.s32 %v876, %v878
      %v880 = vrot.slane %v873, %v879
      %v882 = vunpack.c.l.s4 1966171168
      %v883 = vunpack.c.0.s8 %v882
      %v884 = vlaneseq
      %v885 = vshrl.u32 %v884, 7
      %v886 = vsub.s32 %v883, %v885
      %v887 = vrot.slane %v880, %v886
      %v889 = vlaneseq
      %vm890 = vcmp.ge.s32.totalorder %v889, 0
      %vm891 = vcmp.lt.s32.totalorder %v889, 256
      %vm892 = vmand %vm890, %vm891
      %s893 = scalar_lea.vmem [#allocation2], 2
      %894 = vst.msk [vmem:[%s893] ss:$2 sm:$0x3] %vm892, %v887
      %v897 = vcombine.low %v867, %v868
      %v899 = vunpack.c.l.s4 1966171168
      %v900 = vunpack.c.0.s8 %v899
      %v901 = vlaneseq
      %v902 = vshrl.u32 %v901, 7
      %v903 = vsub.s32 %v900, %v902
      %v904 = vrot.slane %v897, %v903
      %v906 = vunpack.c.l.s4 1966171168
      %v907 = vunpack.c.0.s8 %v906
      %v908 = vlaneseq
      %v909 = vshrl.u32 %v908, 7
      %v910 = vsub.s32 %v907, %v909
      %v911 = vrot.slane %v904, %v910
      %s913 = scalar_lea.vmem [#allocation2], 3
      %914 = vst.msk [vmem:[%s913] ss:$2 sm:$0x3] %vm892, %v911
      %v915 = vld [vmem:[#allocation2] sm:$0x3f]
      %s916 = sld [smem:[#allocation7]]
      %v917 = vstv %s916
      %v918 = vmul.f32 %v917, %v915
      %s919 = sld [smem:[#allocation7 + $0x80]]
      %v920 = vstv %s919
      %v921 = vmul.f32 %v920, %v915
      %v923 = vrot.slane %v921, 7
      %v924 = vrot.slane %v923, 2
      %v926 = vadd.f32 %v918, %v924
      %v929 = vunpack.c.l.s4 857870592
      %v930 = vunpack.c.0.s8 %v929
      %v931 = vlaneseq
      %v932 = vshrl.u32 %v931, 7
      %v933 = vsub.s32 %v930, %v932
      %v934 = vrot.slane %v58, %v933
      %935 = vrot.lane.b32.xlu0 %v934, 111
      %v936 = vpop.permute.xlu0 %935
      %v937 = vrot.slane %v936, 6
      %vm938 = vcmask 908288
      %v939 = vsel %vm938, %v937, %v936
      %v941 = vmul.f32 %v926, %v939
      %v942 = vadd.f32 %v941, 0.0
      %s943 = sld [smem:[#allocation7 + $0x1]]
      %v944 = vstv %s943
      %v945 = vmul.f32 %v944, %v915
      %s946 = sld [smem:[#allocation7 + $0x81]]
      %v947 = vstv %s946
      %v948 = vmul.f32 %v947, %v915
      %v950 = vrot.slane %v948, 7
      %v951 = vrot.slane %v950, 2
      %v953 = vadd.f32 %v945, %v951
      %955 = vrot.lane.b32.xlu0 %v953, 127
      %v956 = vpop.permute.xlu0 %955
      %v957 = vrot.slane %v956, 2
      %vm958 = vcmask 1039360
      %v959 = vsel %vm958, %v956, %v957
      %v961 = vadd.f32 %v942, %v959
      %s962 = sld [smem:[#allocation7 + $0x2]]
      %v963 = vstv %s962
      %v964 = vmul.f32 %v963, %v915
      %s965 = sld [smem:[#allocation7 + $0x82]]
      %v966 = vstv %s965
      %v967 = vmul.f32 %v966, %v915
      %v969 = vrot.slane %v967, 7
      %v970 = vrot.slane %v969, 2
      %v972 = vadd.f32 %v964, %v970
      %v975 = vunpack.c.l.s4 857870592
      %v976 = vunpack.c.0.s8 %v975
      %v977 = vlaneseq
      %v978 = vshrl.u32 %v977, 7
      %v979 = vsub.s32 %v976, %v978
      %v980 = vrot.slane %v60, %v979
      %981 = vrot.lane.b32.xlu0 %v980, 113
      %v982 = vpop.permute.xlu0 %981
      %v983 = vrot.slane %v982, 6
      %vm984 = vcmask 924672
      %v985 = vsel %vm984, %v983, %v982
      %v987 = vmul.f32 %v972, %v985
      %989 = vrot.lane.b32.xlu0 %v987, 126
      %v990 = vpop.permute.xlu0 %989
      %v991 = vrot.slane %v990, 2
      %vm992 = vcmask 1031168
      %v993 = vsel %vm992, %v990, %v991
      %v995 = vadd.f32 %v961, %v993
      %s996 = sld [smem:[#allocation7 + $0x3]]
      %v997 = vstv %s996
      %v998 = vmul.f32 %v997, %v915
      %s999 = sld [smem:[#allocation7 + $0x83]]
      %v1000 = vstv %s999
      %v1001 = vmul.f32 %v1000, %v915
      %v1003 = vrot.slane %v1001, 7
      %v1004 = vrot.slane %v1003, 2
      %v1006 = vadd.f32 %v998, %v1004
      %1007 = vrot.lane.b32.xlu0 %v934, 127
      %v1008 = vpop.permute.xlu0 %1007
      %v1009 = vrot.slane %v1008, 6
      %v1010 = vsel %vm958, %v1009, %v1008
      %v1012 = vmul.f32 %v1006, %v1010
      %1014 = vrot.lane.b32.xlu0 %v1012, 112
      %v1015 = vpop.permute.xlu0 %1014
      %v1016 = vrot.slane %v1015, 2
      %vm1017 = vcmask 916480
      %v1018 = vsel %vm1017, %v1015, %v1016
      %v1020 = vadd.f32 %v995, %v1018
      %v1021 = vld [vmem:[#allocation2 + $0x2] sm:$0xf]
      %s1022 = sld [smem:[#allocation7 + $0x4]]
      %v1023 = vstv %s1022
      %v1024 = vmul.f32 %v1023, %v1021
      %s1025 = sld [smem:[#allocation7 + $0x84]]
      %v1026 = vstv %s1025
      %v1027 = vmul.f32 %v1026, %v1021
      %v1029 = vrot.slane %v1027, 7
      %v1030 = vrot.slane %v1029, 2
      %v1032 = vadd.f32 %v1024, %v1030
      %1034 = vrot.lane.b32.xlu0 %v1032, 111
      %v1035 = vpop.permute.xlu0 %1034
      %v1036 = vrot.slane %v1035, 6
      %v1037 = vsel %vm938, %v1036, %v1035
      %v1039 = vadd.f32 %v1020, %v1037
      %v1040 = vld [vmem:[#allocation2 + $0x2] sm:$0x3f]
      %s1041 = sld [smem:[#allocation7 + $0x5]]
      %v1042 = vstv %s1041
      %v1043 = vmul.f32 %v1042, %v1040
      %s1044 = sld [smem:[#allocation7 + $0x85]]
      %v1045 = vstv %s1044
      %v1046 = vmul.f32 %v1045, %v1040
      %v1048 = vrot.slane %v1046, 7
      %v1049 = vrot.slane %v1048, 2
      %v1051 = vadd.f32 %v1043, %v1049
      %1052 = vrot.lane.b32.xlu0 %v980, 1
      %v1053 = vpop.permute.xlu0 %1052
      %v1054 = vrot.slane %v1053, 6
      %vm1055 = vcmask 7168
      %v1056 = vsel %vm1055, %v1054, %v1053
      %v1058 = vmul.f32 %v1051, %v1056
      %1060 = vrot.lane.b32.xlu0 %v1058, 110
      %v1061 = vpop.permute.xlu0 %1060
      %v1062 = vrot.slane %v1061, 6
      %vm1063 = vcmask 900096
      %v1064 = vsel %vm1063, %v1062, %v1061
      %v1066 = vadd.f32 %v1039, %v1064
      %s1067 = sld [smem:[#allocation7 + $0x6]]
      %v1068 = vstv %s1067
      %v1069 = vmul.f32 %v1068, %v1040
      %s1070 = sld [smem:[#allocation7 + $0x86]]
      %v1071 = vstv %s1070
      %v1072 = vmul.f32 %v1071, %v1040
      %v1074 = vrot.slane %v1072, 7
      %v1075 = vrot.slane %v1074, 2
      %v1077 = vadd.f32 %v1069, %v1075
      %1078 = vrot.lane.b32.xlu0 %v934, 15
      %v1079 = vpop.permute.xlu0 %1078
      %v1080 = vrot.slane %v1079, 6
      %vm1081 = vcmask 121856
      %v1082 = vsel %vm1081, %v1080, %v1079
      %v1084 = vmul.f32 %v1077, %v1082
      %1086 = vrot.lane.b32.xlu0 %v1084, 96
      %v1087 = vpop.permute.xlu0 %1086
      %v1088 = vrot.slane %v1087, 6
      %vm1089 = vcmask 785408
      %v1090 = vsel %vm1089, %v1088, %v1087
      %v1092 = vadd.f32 %v1066, %v1090
      %s1093 = sld [smem:[#allocation7 + $0x7]]
      %v1094 = vstv %s1093
      %v1095 = vmul.f32 %v1094, %v1040
      %s1096 = sld [smem:[#allocation7 + $0x87]]
      %v1097 = vstv %s1096
      %v1098 = vmul.f32 %v1097, %v1040
      %v1100 = vrot.slane %v1098, 7
      %v1101 = vrot.slane %v1100, 2
      %v1103 = vadd.f32 %v1095, %v1101
      %1105 = vrot.lane.b32.xlu0 %v1103, 95
      %v1106 = vpop.permute.xlu0 %1105
      %v1107 = vrot.slane %v1106, 6
      %vm1108 = vcmask 777216
      %v1109 = vsel %vm1108, %v1107, %v1106
      %v1111 = vadd.f32 %v1092, %v1109
      %s1112 = sld [smem:[#allocation7 + $0x8]]
      %v1113 = vstv %s1112
      %v1114 = vmul.f32 %v1113, %v1040
      %s1115 = sld [smem:[#allocation7 + $0x88]]
      %v1116 = vstv %s1115
      %v1117 = vmul.f32 %v1116, %v1040
      %v1119 = vrot.slane %v1117, 7
      %v1120 = vrot.slane %v1119, 2
      %v1122 = vadd.f32 %v1114, %v1120
      %1123 = vrot.lane.b32.xlu0 %v980, 17
      %v1124 = vpop.permute.xlu0 %1123
      %v1125 = vrot.slane %v1124, 6
      %vm1126 = vcmask 138240
      %v1127 = vsel %vm1126, %v1125, %v1124
      %v1129 = vmul.f32 %v1122, %v1127
      %1131 = vrot.lane.b32.xlu0 %v1129, 94
      %v1132 = vpop.permute.xlu0 %1131
      %v1133 = vrot.slane %v1132, 6
      %vm1134 = vcmask 769024
      %v1135 = vsel %vm1134, %v1133, %v1132
      %v1137 = vadd.f32 %v1111, %v1135
      %v1138 = vxor.u32 %v1137, 2147483648
      %v1139 = vmul.f32 %v1138, 1.442695
      %v1140 = vpow.pop %v1139
      %v1141 = vadd.f32 %v1140, 1.0
      %v1142 = vrcp.pop %v1141
      %v1143 = vmul.f32 1.0, %v1142
      %v1145 = vlaneseq
      %v1146 = vshrl.u32 %v1145, 7
      %v1147 = vsub.s32 0, %v1146
      %v1148 = vrot.slane %v1143, %v1147
      %v1149 = vlaneseq
      %v1150 = vshrl.u32 %v1149, 7
      %v1151 = vsub.s32 2, %v1150
      %v1152 = vrot.slane %v1143, %v1151
      %v1153 = vlaneseq
      %v1154 = vshrl.u32 %v1153, 7
      %v1155 = vsub.s32 4, %v1154
      %v1156 = vrot.slane %v1143, %v1155
      %v1160 = vlaneseq
      %v1161 = vshrl.u32 %v1160, 7
      %v1162 = vsub.s32 0, %v1161
      %v1163 = vrot.slane %v1148, %v1162
      %v1164 = vlaneseq
      %v1165 = vshrl.u32 %v1164, 7
      %v1166 = vsub.s32 0, %v1165
      %v1167 = vrot.slane %v1152, %v1166
      %v1168 = vlaneseq
      %v1169 = vshrl.u32 %v1168, 7
      %v1170 = vsub.s32 0, %v1169
      %v1171 = vrot.slane %v1156, %v1170
      %1175 = vrot.lane.b32.xlu0 %v1163, 17
      %v1176 = vpop.permute.xlu0 %1175
      %1177 = vrot.lane.b32.xlu0 %v1167, 17
      %v1178 = vpop.permute.xlu0 %1177
      %1179 = vrot.lane.b32.xlu0 %v1171, 17
      %v1180 = vpop.permute.xlu0 %1179
      %v1181 = vsel %vm1126, %v1176, %v1178
      %v1182 = vsel %vm1126, %v1178, %v1180
      %v1185 = vmul.f32 %v508, %v1181
      %v1186 = vmul.f32 %v509, %v1182
      %v1187 = vmul.f32 %v510, %v1181
      %v1188 = vmul.f32 %v511, %v1182
      %v1189 = vmul.f32 %v551, %v1181
      %v1190 = vmul.f32 %v552, %v1182
      %v1191 = vmul.f32 %v553, %v1181
      %v1192 = vmul.f32 %v554, %v1182
      %v1193 = vmul.f32 %v598, %v1181
      %v1194 = vmul.f32 %v599, %v1182
      %v1195 = vmul.f32 %v600, %v1181
      %v1196 = vmul.f32 %v601, %v1182
      %v1197 = vmul.f32 %v645, %v1181
      %v1198 = vmul.f32 %v646, %v1182
      %v1199 = vmul.f32 %v647, %v1181
      %v1200 = vmul.f32 %v648, %v1182
      %v1201 = vmul.f32 %v692, %v1181
      %v1202 = vmul.f32 %v693, %v1182
      %v1203 = vmul.f32 %v694, %v1181
      %v1204 = vmul.f32 %v695, %v1182
      %v1205 = vmul.f32 %v739, %v1181
      %v1206 = vmul.f32 %v740, %v1182
      %v1207 = vmul.f32 %v741, %v1181
      %v1208 = vmul.f32 %v742, %v1182
      %v1209 = vmul.f32 %v786, %v1181
      %v1210 = vmul.f32 %v787, %v1182
      %v1211 = vmul.f32 %v788, %v1181
      %v1212 = vmul.f32 %v789, %v1182
      %v1213 = vmul.f32 %v833, %v1181
      %v1214 = vmul.f32 %v834, %v1182
      %v1215 = vmul.f32 %v835, %v1181
      %v1216 = vmul.f32 %v836, %v1182
      %v1217 = vmax.f32 %v1185, 0.0
      %v1218 = vmax.f32 %v1186, 0.0
      %v1219 = vmax.f32 %v1187, 0.0
      %v1220 = vmax.f32 %v1188, 0.0
      %v1221 = vmax.f32 %v1189, 0.0
      %v1222 = vmax.f32 %v1190, 0.0
      %v1223 = vmax.f32 %v1191, 0.0
      %v1224 = vmax.f32 %v1192, 0.0
      %v1225 = vmax.f32 %v1193, 0.0
      %v1226 = vmax.f32 %v1194, 0.0
      %v1227 = vmax.f32 %v1195, 0.0
      %v1228 = vmax.f32 %v1196, 0.0
      %v1229 = vmax.f32 %v1197, 0.0
      %v1230 = vmax.f32 %v1198, 0.0
      %v1231 = vmax.f32 %v1199, 0.0
      %v1232 = vmax.f32 %v1200, 0.0
      %v1233 = vmax.f32 %v1201, 0.0
      %v1234 = vmax.f32 %v1202, 0.0
      %v1235 = vmax.f32 %v1203, 0.0
      %v1236 = vmax.f32 %v1204, 0.0
      %v1237 = vmax.f32 %v1205, 0.0
      %v1238 = vmax.f32 %v1206, 0.0
      %v1239 = vmax.f32 %v1207, 0.0
      %v1240 = vmax.f32 %v1208, 0.0
      %v1241 = vmax.f32 %v1209, 0.0
      %v1242 = vmax.f32 %v1210, 0.0
      %v1243 = vmax.f32 %v1211, 0.0
      %v1244 = vmax.f32 %v1212, 0.0
      %v1245 = vmax.f32 %v1213, 0.0
      %v1246 = vmax.f32 %v1214, 0.0
      %v1247 = vmax.f32 %v1215, 0.0
      %v1248 = vmax.f32 %v1216, 0.0
      %s1249 = smul.addr %s69, 8
      %s1250 = scalar_lea.vmem [#allocation8], %s1249
      %1251 = vst [vmem:[%s1250] sm:$0xff] %v1217
      %1252 = vst [vmem:[%s1250 + $0x8] sm:$0xff] %v1218
      %1253 = vst [vmem:[%s1250 + $0x10] sm:$0xff] %v1219
      %1254 = vst [vmem:[%s1250 + $0x18] sm:$0xff] %v1220
      %1255 = vst [vmem:[%s1250 + $0x20] sm:$0xff] %v1221
      %1256 = vst [vmem:[%s1250 + $0x28] sm:$0xff] %v1222
      %1257 = vst [vmem:[%s1250 + $0x30] sm:$0xff] %v1223
      %1258 = vst [vmem:[%s1250 + $0x38] sm:$0xff] %v1224
      %1259 = vst [vmem:[%s1250 + $0x40] sm:$0xff] %v1225
      %1260 = vst [vmem:[%s1250 + $0x48] sm:$0xff] %v1226
      %1261 = vst [vmem:[%s1250 + $0x50] sm:$0xff] %v1227
      %1262 = vst [vmem:[%s1250 + $0x58] sm:$0xff] %v1228
      %1263 = vst [vmem:[%s1250 + $0x60] sm:$0xff] %v1229
      %1264 = vst [vmem:[%s1250 + $0x68] sm:$0xff] %v1230
      %1265 = vst [vmem:[%s1250 + $0x70] sm:$0xff] %v1231
      %1266 = vst [vmem:[%s1250 + $0x78] sm:$0xff] %v1232
      %1267 = vst [vmem:[%s1250 + $0x80] sm:$0xff] %v1233
      %1268 = vst [vmem:[%s1250 + $0x88] sm:$0xff] %v1234
      %1269 = vst [vmem:[%s1250 + $0x90] sm:$0xff] %v1235
      %1270 = vst [vmem:[%s1250 + $0x98] sm:$0xff] %v1236
      %1271 = vst [vmem:[%s1250 + $0xa0] sm:$0xff] %v1237
      %1272 = vst [vmem:[%s1250 + $0xa8] sm:$0xff] %v1238
      %1273 = vst [vmem:[%s1250 + $0xb0] sm:$0xff] %v1239
      %1274 = vst [vmem:[%s1250 + $0xb8] sm:$0xff] %v1240
      %1275 = vst [vmem:[%s1250 + $0xc0] sm:$0xff] %v1241
      %1276 = vst [vmem:[%s1250 + $0xc8] sm:$0xff] %v1242
      %1277 = vst [vmem:[%s1250 + $0xd0] sm:$0xff] %v1243
      %1278 = vst [vmem:[%s1250 + $0xd8] sm:$0xff] %v1244
      %1279 = vst [vmem:[%s1250 + $0xe0] sm:$0xff] %v1245
      %1280 = vst [vmem:[%s1250 + $0xe8] sm:$0xff] %v1246
      %1281 = vst [vmem:[%s1250 + $0xf0] sm:$0xff] %v1247
      %1282 = vst [vmem:[%s1250 + $0xf8] sm:$0xff] %v1248
    $region42: #{tpu_custom_call.1} parent=1 // loop_footer
      %s68 = sadd.s32 1, %s64
    $region43: #{tpu_custom_call.1} parent=1 // loop_footer_branch
      %63 = sbr.rel target = $region39
    $region44: #{tpu_custom_call.1} parent=1 // loop_exit
      _
    // Predicated region
    $region45: #{tpu_custom_call.1} parent=1 // pred_check
      _
    $region46: #{tpu_custom_call.1} parent=1 // pred_check_branch
      %1284 = sbr.rel (0) target = $region48
    $region47: #{tpu_custom_call.1} parent=1 // pred_region
      %s1286 = ssub.s32 8192, 8192
      %1287 = vsyncadd [#allocation5], %s1286
      %s1288 = sshll.u32 [#allocation8], 4
      %s1289 = int_to_ptr.vmem [resolvable:$true] %s1288
      %1294 = dma.vmem_to_hbm [thread:$0]  %s1289, 8192, %s7, [#allocation5], 256, 256, 16
    $region48: #{tpu_custom_call.1} parent=1 // pred_fallthru
      _
    // Predicated region
    $region49: #{tpu_custom_call.1} parent=1 // pred_check
      _
    $region50: #{tpu_custom_call.1} parent=1 // pred_check_branch
      %1296 = sbr.rel (0) target = $region52
    $region51: #{tpu_custom_call.1} parent=1 // pred_region
      %1297 = dma.done [#allocation5], 8192
    $region52: #{tpu_custom_call.1} parent=1 // pred_fallthru
      _
    %1298 = vsyncpa [#allocation4], 1
    %1299 = vsyncpa [#allocation5], 1
    %1300 = vsyncpa [#allocation6], 1

</llo_original>
